<compile_context>
chip_gen: v6e
topology: v6e:2x2x1
jax: 0.10.0
libtpu: 0.0.40
codegen_flags: <defaults>
</compile_context>

<pallas_src>
import functools
import math

import jax
import jax.numpy as jnp
from jax import lax
from jax.experimental import pallas as pl
from jax.experimental.pallas import tpu as pltpu


# ----------------------------------------------------------------------------
# Helpers
# ----------------------------------------------------------------------------
def _bytes(shape, dtype) -> int:
    return math.prod(shape) * jnp.dtype(dtype).itemsize


def _pad_len(L: int) -> int:
    m = 128 if L >= 128 else 8
    return ((L + m - 1) // m) * m


def _pick_head_group(heads: int, head_dim: int) -> int:
    """Heads packed per group: largest divisor of `heads` whose packed lane width
    (g * head_dim) is a multiple of 128 and <= 256. Tiny configs: all heads."""
    for g in range(heads, 0, -1):
        if heads % g == 0 and (g * head_dim) % 128 == 0 and g * head_dim <= 256:
            return g
    return heads


def _pick_row_tile(Lp: int, B: int) -> int:
    t = Lp
    for cand in (512, 256, 128, 64, 32, 16, 8):
        if cand <= Lp and Lp % cand == 0:
            t = cand
            break
    # v7x: keep >= 2 parallel work units when B == 1 (2 TensorCores per chip).
    if B == 1 and Lp // t < 2 and t % 16 == 0:
        t //= 2
    return t


def _physical_vmem_bytes() -> int:
    try:
        fn = getattr(pltpu, "get_tpu_info", None)
        if fn is not None:
            cap = int(getattr(fn(), "vmem_capacity_bytes", 0) or 0)
            if cap > 0:
                return cap
    except Exception:
        pass
    return 64 << 20  # conservative default (v7x-sized VMEM)


def _vmem_limit(est_bytes: int) -> int:
    phys = _physical_vmem_bytes()
    # 128 MiB parts (v5e/v6e): allow up to 112 MiB; 64 MiB parts (v7x): <= 52 MiB.
    cap = (112 << 20) if phys >= (96 << 20) else (52 << 20)
    return int(min(max(est_bytes, 32 << 20), cap))


# ----------------------------------------------------------------------------
# Kernel 1: attention half of a ResidualAttentionBlock
#   out = x + out_proj( MHA( LN1(x) ) ),  grid = (B,), weights VMEM-resident.
# ----------------------------------------------------------------------------
def _attn_block_kernel(x_ref, ln1w_ref, ln1b_ref, wqkv_ref, bqkv_ref, wo_ref, bo_ref,
                       o_ref, x1_s, acc_s, ctx_s, *, hd, G, HG, L_real):
    cdt = x1_s.dtype                     # MXU input dtype (bf16)
    Lp = x_ref.shape[1]
    Ghd = G * hd
    eps = 1e-5

    # LN1 in f32 (matches torch fp16-safe LayerNorm subclass); residual + out-proj bias.
    xf = x_ref[0].astype(jnp.float32)                                  # (Lp, D)
    mu = jnp.mean(xf, axis=-1, keepdims=True)
    var = jnp.mean(jnp.square(xf - mu), axis=-1, keepdims=True)
    x1 = (xf - mu) * lax.rsqrt(var + eps)
    x1 = x1 * ln1w_ref[0] + ln1b_ref[0]
    x1_s[...] = x1.astype(cdt)
    acc_s[...] = xf + bo_ref[0]

    need_mask = Lp != L_real
    if need_mask:
        # pad keys must never receive attention weight (hoisted out of the loop)
        key_mask = lax.broadcasted_iota(jnp.int32, (Lp, Lp), 1) < L_real

    def _group(g, carry):
        # packed [q | k | v] projection for this head group (weights resident in VMEM;
        # q scale is pre-folded into wq/bq).
        qkv = (jnp.dot(x1_s[...], wqkv_ref[g], preferred_element_type=jnp.float32)
               + bqkv_ref[g]).astype(cdt)                              # (Lp, 3*Ghd)
        for i in range(G):                                             # small static unroll
            lo = i * hd
            qh = qkv[:, lo:lo + hd]
            kh = qkv[:, Ghd + lo:Ghd + lo + hd]
            vh = qkv[:, 2 * Ghd + lo:2 * Ghd + lo + hd]
            s = lax.dot_general(qh, kh, (((1,), (1,)), ((), ())),
                                preferred_element_type=jnp.float32)    # (Lp, Lp) f32
            if need_mask:
                s = jnp.where(key_mask, s, -1e30)
            s = s - jnp.max(s, axis=-1, keepdims=True)
            p = jnp.exp(s)
            p = p * pl.reciprocal(jnp.sum(p, axis=-1, keepdims=True), approx=True)
            ctx = jnp.dot(p.astype(cdt), vh, preferred_element_type=jnp.float32)
            ctx_s[:, lo:lo + hd] = ctx.astype(cdt)                     # stage head slice
        # ONE full-depth (Lp, Ghd) @ (Ghd, D) out-projection per group.
        acc_s[...] += jnp.dot(ctx_s[...], wo_ref[g], preferred_element_type=jnp.float32)
        return carry

    lax.fori_loop(0, HG, _group, 0)
    o_ref[0] = acc_s[...].astype(o_ref.dtype)


def _attention_block(x, p, L_real):
    B, Lp, D = x.shape
    HG = p["wqkv_g"].shape[0]
    Ghd = p["wqkv_g"].shape[2] // 3
    hd = p["head_dim"]
    G = Ghd // hd
    cdt = p["wqkv_g"].dtype

    kernel = functools.partial(_attn_block_kernel, hd=hd, G=G, HG=HG, L_real=L_real)

    in_specs = [
        pl.BlockSpec((1, Lp, D), lambda b: (b, 0, 0)),            # x (per batch)
        pl.BlockSpec((1, D), lambda b: (0, 0)),                   # ln1_w (resident)
        pl.BlockSpec((1, D), lambda b: (0, 0)),                   # ln1_b
        pl.BlockSpec((HG, D, 3 * Ghd), lambda b: (0, 0, 0)),      # wqkv (resident, all groups)
        pl.BlockSpec((HG, 1, 3 * Ghd), lambda b: (0, 0, 0)),      # bqkv
        pl.BlockSpec((HG, Ghd, D), lambda b: (0, 0, 0)),          # wo   (resident)
        pl.BlockSpec((1, D), lambda b: (0, 0)),                   # bo
    ]
    out_spec = pl.BlockSpec((1, Lp, D), lambda b: (b, 0, 0))

    est = (
        4 * _bytes((1, Lp, D), x.dtype)                 # x + out, double-buffered
        + 2 * _bytes((HG, D, 3 * Ghd), cdt)             # resident wqkv (+ revolving slot)
        + 2 * _bytes((HG, Ghd, D), cdt)                 # resident wo
        + 2 * _bytes((HG, 1, 3 * Ghd), jnp.float32)
        + 6 * _bytes((1, D), jnp.float32)
        + _bytes((Lp, D), cdt) + _bytes((Lp, D), jnp.float32) + _bytes((Lp, Ghd), cdt)
        + 2 * _bytes((Lp, 3 * Ghd), jnp.float32)        # qkv temps
        + (G + 2) * _bytes((Lp, Lp), jnp.float32)       # score / softmax temps
        + (8 << 20)                                     # headroom
    )

    return pl.pallas_call(
        kernel,
        out_shape=jax.ShapeDtypeStruct((B, Lp, D), x.dtype),
        grid=(B,),
        in_specs=in_specs,
        out_specs=out_spec,
        scratch_shapes=[pltpu.VMEM((Lp, D), cdt),           # LN1(x)
                        pltpu.VMEM((Lp, D), jnp.float32),   # f32 output accumulator
                        pltpu.VMEM((Lp, Ghd), cdt)],        # per-group ctx staging
        compiler_params=pltpu.CompilerParams(
            dimension_semantics=("parallel",),
            vmem_limit_bytes=_vmem_limit(est)),
    )(x, p["ln1_w"], p["ln1_b"], p["wqkv_g"], p["bqkv_g"], p["wo_g"], p["bo"])


# ----------------------------------------------------------------------------
# Kernel 2: MLP half of a ResidualAttentionBlock
#   out = x + c_proj( QuickGELU( c_fc( LN2(x) ) ) )
# grid = (B, Lp//Lt), both "parallel"; wfc/wproj VMEM-resident (constant index maps).
# ----------------------------------------------------------------------------
def _mlp_block_kernel(x_ref, ln2w_ref, ln2b_ref, wfc_ref, bfc_ref, wproj_ref, bproj_ref,
                      o_ref):
    cdt = wfc_ref.dtype
    eps = 1e-5
    xf = x_ref[0].astype(jnp.float32)                                  # (Lt, D)
    mu = jnp.mean(xf, axis=-1, keepdims=True)
    var = jnp.mean(jnp.square(xf - mu), axis=-1, keepdims=True)
    x2 = ((xf - mu) * lax.rsqrt(var + eps) * ln2w_ref[0] + ln2b_ref[0]).astype(cdt)
    h = jnp.dot(x2, wfc_ref[...], preferred_element_type=jnp.float32) + bfc_ref[...]
    h = h * jax.nn.sigmoid(1.702 * h)                                  # QuickGELU (f32)
    y = xf + jnp.dot(h.astype(cdt), wproj_ref[...],
                     preferred_element_type=jnp.float32) + bproj_ref[...]
    o_ref[0] = y.astype(o_ref.dtype)


def _mlp_block(x, p):
    B, Lp, D = x.shape
    F = p["wfc"].shape[1]
    Lt = _pick_row_tile(Lp, B)
    cdt = p["wfc"].dtype

    in_specs = [
        pl.BlockSpec((1, Lt, D), lambda b, r: (b, r, 0)),   # x row tile
        pl.BlockSpec((1, D), lambda b, r: (0, 0)),          # ln2_w
        pl.BlockSpec((1, D), lambda b, r: (0, 0)),          # ln2_b
        pl.BlockSpec((D, F), lambda b, r: (0, 0)),          # wfc   (resident)
        pl.BlockSpec((1, F), lambda b, r: (0, 0)),          # bfc
        pl.BlockSpec((F, D), lambda b, r: (0, 0)),          # wproj (resident)
        pl.BlockSpec((1, D), lambda b, r: (0, 0)),          # bproj
    ]
    out_spec = pl.BlockSpec((1, Lt, D), lambda b, r: (b, r, 0))

    est = (
        4 * _bytes((1, Lt, D), x.dtype)
        + 2 * _bytes((D, F), cdt) + 2 * _bytes((F, D), cdt)
        + _bytes((1, F), jnp.float32)
        + 3 * _bytes((Lt, F), jnp.float32)                  # hidden temps
        + 4 * _bytes((Lt, D), jnp.float32)
        + (8 << 20)
    )

    return pl.pallas_call(
        _mlp_block_kernel,
        out_shape=jax.ShapeDtypeStruct((B, Lp, D), x.dtype),
        grid=(B, Lp // Lt),
        in_specs=in_specs,
        out_specs=out_spec,
        compiler_params=pltpu.CompilerParams(
            dimension_semantics=("parallel", "parallel"),
            vmem_limit_bytes=_vmem_limit(est)),
    )(x, p["ln2_w"], p["ln2_b"], p["wfc"], p["bfc"], p["wproj"], p["bproj"])


# ----------------------------------------------------------------------------
# Parameters: torch-layout init + kernel-layout preparation
# ----------------------------------------------------------------------------
def init_transformer_params(key, width, layers):
    """Deterministic init; big matrices stored pre-transposed as (in_dim, out_dim).
    NOTE: real torch checkpoints store (out, in) and must be transposed first."""
    D = width
    params = []
    for _ in range(layers):
        keys = jax.random.split(key, 7)
        key = keys[0]
        params.append({
            "ln1_w": jnp.ones((D,), jnp.float32),
            "ln1_b": jnp.zeros((D,), jnp.float32),
            "wqkv": 0.02 * jax.random.normal(keys[1], (D, 3 * D), jnp.float32),
            "bqkv": 0.01 * jax.random.normal(keys[2], (3 * D,), jnp.float32),
            "wo": 0.02 * jax.random.normal(keys[3], (D, D), jnp.float32),
            "bo": jnp.zeros((D,), jnp.float32),
            "ln2_w": jnp.ones((D,), jnp.float32),
            "ln2_b": jnp.zeros((D,), jnp.float32),
            "wfc": 0.02 * jax.random.normal(keys[4], (D, 4 * D), jnp.float32),
            "bfc": 0.01 * jax.random.normal(keys[5], (4 * D,), jnp.float32),
            "wproj": 0.02 * jax.random.normal(keys[6], (4 * D, D), jnp.float32),
            "bproj": jnp.zeros((D,), jnp.float32),
        })
    return params


def prepare_layer_params(raw, heads, compute_dtype=jnp.bfloat16):
    """Kernel layout: bf16 matmul weights (LN params / biases f32), 1/sqrt(head_dim)
    folded into q, q/k/v packed per head-group as (HG, D, 3*Ghd), wo as (HG, Ghd, D)."""
    D = raw["ln1_w"].shape[-1]
    hd = D // heads
    G = _pick_head_group(heads, hd)
    HG = heads // G
    Ghd = G * hd
    scale = 1.0 / math.sqrt(hd)

    wqkv, bqkv = raw["wqkv"], raw["bqkv"]
    wq = wqkv[:, 0:D] * scale
    wk = wqkv[:, D:2 * D]
    wv = wqkv[:, 2 * D:3 * D]
    bq = bqkv[0:D] * scale
    bk = bqkv[D:2 * D]
    bv = bqkv[2 * D:3 * D]

    def g3(w):   # (D, D) -> (HG, D, Ghd), heads grouped along output columns
        return w.reshape(D, HG, Ghd).transpose(1, 0, 2)

    def gb(b):   # (D,) -> (HG, 1, Ghd)
        return b.reshape(HG, 1, Ghd)

    wqkv_g = jnp.concatenate([g3(wq), g3(wk), g3(wv)], axis=-1)   # (HG, D, 3*Ghd)
    bqkv_g = jnp.concatenate([gb(bq), gb(bk), gb(bv)], axis=-1)   # (HG, 1, 3*Ghd)

    return {
        "head_dim": hd,
        "ln1_w": raw["ln1_w"].reshape(1, D).astype(jnp.float32),
        "ln1_b": raw["ln1_b"].reshape(1, D).astype(jnp.float32),
        "wqkv_g": wqkv_g.astype(compute_dtype),
        "bqkv_g": bqkv_g.astype(jnp.float32),
        "wo_g": raw["wo"].reshape(HG, Ghd, D).astype(compute_dtype),
        "bo": raw["bo"].reshape(1, D).astype(jnp.float32),
        "ln2_w": raw["ln2_w"].reshape(1, D).astype(jnp.float32),
        "ln2_b": raw["ln2_b"].reshape(1, D).astype(jnp.float32),
        "wfc": raw["wfc"].astype(compute_dtype),
        "bfc": raw["bfc"].reshape(1, 4 * D).astype(jnp.float32),
        "wproj": raw["wproj"].astype(compute_dtype),
        "bproj": raw["bproj"].reshape(1, D).astype(jnp.float32),
    }


# ----------------------------------------------------------------------------
# Transformer wrapper (text_layer=False, maple=False, DPAM_layer=None path)
# ----------------------------------------------------------------------------
def transformer_forward(x_lnd, prepared_params, out_layers=(6, 12, 18, 24)):
    """Mirrors Transformer.forward (ori_CLIP_with_patch_forward).

    x_lnd: (L, N, D) — same axis convention as the torch module.
    Returns ([x, x], out_tokens); x and every token are (L, N, D).
    """
    L, N, D = x_lnd.shape
    x = jnp.transpose(x_lnd, (1, 0, 2))          # (B, L, D) kernel layout
    Lp = _pad_len(L)
    if Lp != L:
        # pad once; pad keys are masked inside the attention softmax, pad rows sliced off.
        x = jnp.pad(x, ((0, 0), (0, Lp - L), (0, 0)))

    out_tokens = []
    for idx, p in enumerate(prepared_params, start=1):
        # TODO(synk): cross-pallas_call prefetch of layer idx+1 weights (P10) not implemented.
        x = _attention_block(x, p, L)
        x = _mlp_block(x, p)
        if idx in out_layers:
            out_tokens.append(jnp.transpose(x[:, :L, :], (1, 0, 2)))
    x_out = jnp.transpose(x[:, :L, :], (1, 0, 2))
    return [x_out, x_out], out_tokens


# ----------------------------------------------------------------------------
if __name__ == "__main__":
    # Small, shape-consistent configuration (L=13 exercises the pad/mask path).
    L, B, D, H, LAYERS = 13, 2, 32, 4, 2
    out_layers = (1, 2)

    key = jax.random.PRNGKey(0)
    kx, kp = jax.random.split(key)
    x = jax.random.normal(kx, (L, B, D), jnp.float32).astype(jnp.bfloat16)

    raw_params = init_transformer_params(kp, width=D, layers=LAYERS)
    params = [prepare_layer_params(r, heads=H) for r in raw_params]

    x_pair, out_tokens = transformer_forward(x, params, out_layers=out_layers)
    jax.block_until_ready(x_pair[0])
    for t in out_tokens:
        jax.block_until_ready(t)

    assert x_pair[0].shape == (L, B, D)
    assert x_pair[0].dtype == x.dtype
    assert len(out_tokens) == len(out_layers)
    assert bool(jnp.isfinite(x_pair[0].astype(jnp.float32)).all())
    print("KERNEL_OK")
</pallas_src>

<mosaic_0001>
module attributes {stable_mosaic.version = 11 : i64} {
  func.func @_attn_block_kernel(%arg0: i32, %arg1: memref<1x16x32xbf16, #tpu.memory_space<vmem>>, %arg2: memref<1x32xf32, #tpu.memory_space<vmem>>, %arg3: memref<1x32xf32, #tpu.memory_space<vmem>>, %arg4: memref<1x32x96xbf16, #tpu.memory_space<vmem>>, %arg5: memref<1x1x96xf32, #tpu.memory_space<vmem>>, %arg6: memref<1x32x32xbf16, #tpu.memory_space<vmem>>, %arg7: memref<1x32xf32, #tpu.memory_space<vmem>>, %arg8: memref<1x16x32xbf16, #tpu.memory_space<vmem>>, %arg9: memref<16x32xbf16, #tpu.memory_space<vmem>>, %arg10: memref<16x32xf32, #tpu.memory_space<vmem>>, %arg11: memref<16x32xbf16, #tpu.memory_space<vmem>>) attributes {dimension_semantics = [#tpu.dimension_semantics<parallel>], iteration_bounds = array<i64: 2>, scalar_prefetch = 0 : i64, scratch_operands = 3 : i64, tpu.core_type = #tpu.core_type<tc>, window_params = [{transform_indices = @transform_0, window_bounds = array<i64: 1, 16, 32>}, {pipeline_mode = #tpu.pipeline_mode<synchronous>, transform_indices = @transform_1, window_bounds = array<i64: 1, 32>}, {pipeline_mode = #tpu.pipeline_mode<synchronous>, transform_indices = @transform_2, window_bounds = array<i64: 1, 32>}, {pipeline_mode = #tpu.pipeline_mode<synchronous>, transform_indices = @transform_3, window_bounds = array<i64: 1, 32, 96>}, {pipeline_mode = #tpu.pipeline_mode<synchronous>, transform_indices = @transform_4, window_bounds = array<i64: 1, 1, 96>}, {pipeline_mode = #tpu.pipeline_mode<synchronous>, transform_indices = @transform_5, window_bounds = array<i64: 1, 32, 32>}, {pipeline_mode = #tpu.pipeline_mode<synchronous>, transform_indices = @transform_6, window_bounds = array<i64: 1, 32>}, {transform_indices = @transform_7, window_bounds = array<i64: 1, 16, 32>}]} {
    %c0 = arith.constant 0 : index
    %c0_0 = arith.constant 0 : index
    %c0_1 = arith.constant 0 : index
    %0 = vector.load %arg1[%c0, %c0_0, %c0_1] : memref<1x16x32xbf16, #tpu.memory_space<vmem>>, vector<1x16x32xbf16>
    %1 = vector.shape_cast %0 : vector<1x16x32xbf16> to vector<16x32xbf16>
    %2 = arith.extf %1 : vector<16x32xbf16> to vector<16x32xf32>
    %cst = arith.constant dense<0.000000e+00> : vector<16xf32>
    %3 = vector.multi_reduction <add>, %2, %cst [1] : vector<16x32xf32> to vector<16xf32>
    %4 = vector.shape_cast %3 : vector<16xf32> to vector<16x1xf32>
    %cst_2 = arith.constant 3.200000e+01 : f32
    %5 = vector.broadcast %cst_2 : f32 to vector<16x1xf32>
    %6 = arith.divf %4, %5 : vector<16x1xf32>
    %7 = vector.broadcast %6 : vector<16x1xf32> to vector<16x32xf32>
    %8 = arith.subf %2, %7 : vector<16x32xf32>
    %9 = arith.mulf %8, %8 : vector<16x32xf32>
    %cst_3 = arith.constant dense<0.000000e+00> : vector<16xf32>
    %10 = vector.multi_reduction <add>, %9, %cst_3 [1] : vector<16x32xf32> to vector<16xf32>
    %11 = vector.shape_cast %10 : vector<16xf32> to vector<16x1xf32>
    %cst_4 = arith.constant 3.200000e+01 : f32
    %12 = vector.broadcast %cst_4 : f32 to vector<16x1xf32>
    %13 = arith.divf %11, %12 : vector<16x1xf32>
    %14 = vector.broadcast %6 : vector<16x1xf32> to vector<16x32xf32>
    %15 = arith.subf %2, %14 : vector<16x32xf32>
    %cst_5 = arith.constant 9.99999974E-6 : f32
    %16 = vector.broadcast %cst_5 : f32 to vector<16x1xf32>
    %17 = arith.addf %13, %16 : vector<16x1xf32>
    %18 = math.rsqrt %17 : vector<16x1xf32>
    %19 = vector.broadcast %18 : vector<16x1xf32> to vector<16x32xf32>
    %20 = arith.mulf %15, %19 : vector<16x32xf32>
    %c0_6 = arith.constant 0 : index
    %c0_7 = arith.constant 0 : index
    %21 = vector.load %arg2[%c0_6, %c0_7] : memref<1x32xf32, #tpu.memory_space<vmem>>, vector<1x32xf32>
    %22 = vector.shape_cast %21 : vector<1x32xf32> to vector<32xf32>
    %23 = vector.shape_cast %22 : vector<32xf32> to vector<1x32xf32>
    %24 = vector.broadcast %23 : vector<1x32xf32> to vector<16x32xf32>
    %25 = arith.mulf %20, %24 : vector<16x32xf32>
    %c0_8 = arith.constant 0 : index
    %c0_9 = arith.constant 0 : index
    %26 = vector.load %arg3[%c0_8, %c0_9] : memref<1x32xf32, #tpu.memory_space<vmem>>, vector<1x32xf32>
    %27 = vector.shape_cast %26 : vector<1x32xf32> to vector<32xf32>
    %28 = vector.shape_cast %27 : vector<32xf32> to vector<1x32xf32>
    %29 = vector.broadcast %28 : vector<1x32xf32> to vector<16x32xf32>
    %30 = arith.addf %25, %29 : vector<16x32xf32>
    %31 = arith.truncf %30 : vector<16x32xf32> to vector<16x32xbf16>
    %c0_10 = arith.constant 0 : index
    %c0_11 = arith.constant 0 : index
    %32 = vector.load %arg9[%c0_10, %c0_11] : memref<16x32xbf16, #tpu.memory_space<vmem>>, vector<16x32xbf16>
    tpu.vector_store %arg9[%c0_10, %c0_11], %31 {strides = array<i32>} : memref<16x32xbf16, #tpu.memory_space<vmem>>, vector<16x32xbf16>,
    %c0_12 = arith.constant 0 : index
    %c0_13 = arith.constant 0 : index
    %33 = vector.load %arg7[%c0_12, %c0_13] : memref<1x32xf32, #tpu.memory_space<vmem>>, vector<1x32xf32>
    %34 = vector.shape_cast %33 : vector<1x32xf32> to vector<32xf32>
    %35 = vector.shape_cast %34 : vector<32xf32> to vector<1x32xf32>
    %36 = vector.broadcast %35 : vector<1x32xf32> to vector<16x32xf32>
    %37 = arith.addf %2, %36 : vector<16x32xf32>
    %c0_14 = arith.constant 0 : index
    %c0_15 = arith.constant 0 : index
    %38 = vector.load %arg10[%c0_14, %c0_15] : memref<16x32xf32, #tpu.memory_space<vmem>>, vector<16x32xf32>
    tpu.vector_store %arg10[%c0_14, %c0_15], %37 {strides = array<i32>} : memref<16x32xf32, #tpu.memory_space<vmem>>, vector<16x32xf32>,
    %39 = tpu.iota {dimensions = array<i32: 1>} : vector<16x16xi32>
    %c13_i32 = arith.constant 13 : i32
    %40 = vector.broadcast %c13_i32 : i32 to vector<16x16xi32>
    %41 = arith.cmpi slt, %39, %40 : vector<16x16xi32>
    %c0_i32 = arith.constant 0 : i32
    %c0_16 = arith.constant 0 : index
    %c0_17 = arith.constant 0 : index
    %42 = vector.load %arg9[%c0_16, %c0_17] : memref<16x32xbf16, #tpu.memory_space<vmem>>, vector<16x32xbf16>
    %43 = arith.index_cast %c0_i32 : i32 to index
    %c0_18 = arith.constant 0 : index
    %c0_19 = arith.constant 0 : index
    %44 = vector.load %arg4[%43, %c0_18, %c0_19] : memref<1x32x96xbf16, #tpu.memory_space<vmem>>, vector<1x32x96xbf16>
    %45 = vector.shape_cast %44 : vector<1x32x96xbf16> to vector<32x96xbf16>
    %cst_20 = arith.constant dense<0.000000e+00> : vector<16x96xf32>
    %46 = tpu.matmul %42, %45, %cst_20 {dimension_numbers = #tpu.dot_dimension_numbers<[1], [0], [0], [1], [0, 0, 1, 1], [], []>} : vector<16x32xbf16>, vector<32x96xbf16>, vector<16x96xf32> -> vector<16x96xf32>
    %47 = arith.index_cast %c0_i32 : i32 to index
    %c0_21 = arith.constant 0 : index
    %c0_22 = arith.constant 0 : index
    %48 = vector.load %arg5[%47, %c0_21, %c0_22] : memref<1x1x96xf32, #tpu.memory_space<vmem>>, vector<1x1x96xf32>
    %49 = vector.shape_cast %48 : vector<1x1x96xf32> to vector<1x96xf32>
    %50 = vector.broadcast %49 : vector<1x96xf32> to vector<16x96xf32>
    %51 = arith.addf %46, %50 : vector<16x96xf32>
    %52 = arith.truncf %51 : vector<16x96xf32> to vector<16x96xbf16>
    %53 = vector.extract_strided_slice %52 {offsets = [0, 0], sizes = [16, 8], strides = [1, 1]} : vector<16x96xbf16> to vector<16x8xbf16>
    %54 = vector.extract_strided_slice %52 {offsets = [0, 32], sizes = [16, 8], strides = [1, 1]} : vector<16x96xbf16> to vector<16x8xbf16>
    %55 = vector.extract_strided_slice %52 {offsets = [0, 64], sizes = [16, 8], strides = [1, 1]} : vector<16x96xbf16> to vector<16x8xbf16>
    %cst_23 = arith.constant dense<0.000000e+00> : vector<16x16xf32>
    %56 = tpu.matmul %53, %54, %cst_23 {dimension_numbers = #tpu.dot_dimension_numbers<[1], [1], [0], [0], [0, 0, 1, 0], [], []>} : vector<16x8xbf16>, vector<16x8xbf16>, vector<16x16xf32> -> vector<16x16xf32>
    %cst_24 = arith.constant -1.000000e+30 : f32
    %57 = vector.broadcast %cst_24 : f32 to vector<16x16xf32>
    %58 = arith.select %41, %56, %57 : vector<16x16xi1>, vector<16x16xf32>
    %cst_25 = arith.constant dense<0xFF800000> : vector<16xf32>
    %59 = vector.multi_reduction <maximumf>, %58, %cst_25 [1] : vector<16x16xf32> to vector<16xf32>
    %60 = vector.shape_cast %59 : vector<16xf32> to vector<16x1xf32>
    %61 = vector.broadcast %60 : vector<16x1xf32> to vector<16x16xf32>
    %62 = arith.subf %58, %61 : vector<16x16xf32>
    %63 = math.exp %62 : vector<16x16xf32>
    %cst_26 = arith.constant dense<0.000000e+00> : vector<16xf32>
    %64 = vector.multi_reduction <add>, %63, %cst_26 [1] : vector<16x16xf32> to vector<16xf32>
    %65 = vector.shape_cast %64 : vector<16xf32> to vector<16x1xf32>
    %66 = tpu.reciprocal %65 {approx = true} : vector<16x1xf32> -> vector<16x1xf32>
    %67 = vector.broadcast %66 : vector<16x1xf32> to vector<16x16xf32>
    %68 = arith.mulf %63, %67 : vector<16x16xf32>
    %69 = arith.truncf %68 : vector<16x16xf32> to vector<16x16xbf16>
    %cst_27 = arith.constant dense<0.000000e+00> : vector<16x8xf32>
    %70 = tpu.matmul %69, %55, %cst_27 {dimension_numbers = #tpu.dot_dimension_numbers<[1], [0], [0], [1], [0, 0, 1, 1], [], []>} : vector<16x16xbf16>, vector<16x8xbf16>, vector<16x8xf32> -> vector<16x8xf32>
    %71 = arith.truncf %70 : vector<16x8xf32> to vector<16x8xbf16>
    %c0_28 = arith.constant 0 : index
    %c0_29 = arith.constant 0 : index
    %72 = vector.load %arg11[%c0_28, %c0_29] : memref<16x32xbf16, #tpu.memory_space<vmem>>, vector<16x8xbf16>
    tpu.vector_store %arg11[%c0_28, %c0_29], %71 {strides = array<i32>} : memref<16x32xbf16, #tpu.memory_space<vmem>>, vector<16x8xbf16>,
    %73 = vector.extract_strided_slice %52 {offsets = [0, 8], sizes = [16, 8], strides = [1, 1]} : vector<16x96xbf16> to vector<16x8xbf16>
    %74 = vector.extract_strided_slice %52 {offsets = [0, 40], sizes = [16, 8], strides = [1, 1]} : vector<16x96xbf16> to vector<16x8xbf16>
    %75 = vector.extract_strided_slice %52 {offsets = [0, 72], sizes = [16, 8], strides = [1, 1]} : vector<16x96xbf16> to vector<16x8xbf16>
    %cst_30 = arith.constant dense<0.000000e+00> : vector<16x16xf32>
    %76 = tpu.matmul %73, %74, %cst_30 {dimension_numbers = #tpu.dot_dimension_numbers<[1], [1], [0], [0], [0, 0, 1, 0], [], []>} : vector<16x8xbf16>, vector<16x8xbf16>, vector<16x16xf32> -> vector<16x16xf32>
    %cst_31 = arith.constant -1.000000e+30 : f32
    %77 = vector.broadcast %cst_31 : f32 to vector<16x16xf32>
    %78 = arith.select %41, %76, %77 : vector<16x16xi1>, vector<16x16xf32>
    %cst_32 = arith.constant dense<0xFF800000> : vector<16xf32>
    %79 = vector.multi_reduction <maximumf>, %78, %cst_32 [1] : vector<16x16xf32> to vector<16xf32>
    %80 = vector.shape_cast %79 : vector<16xf32> to vector<16x1xf32>
    %81 = vector.broadcast %80 : vector<16x1xf32> to vector<16x16xf32>
    %82 = arith.subf %78, %81 : vector<16x16xf32>
    %83 = math.exp %82 : vector<16x16xf32>
    %cst_33 = arith.constant dense<0.000000e+00> : vector<16xf32>
    %84 = vector.multi_reduction <add>, %83, %cst_33 [1] : vector<16x16xf32> to vector<16xf32>
    %85 = vector.shape_cast %84 : vector<16xf32> to vector<16x1xf32>
    %86 = tpu.reciprocal %85 {approx = true} : vector<16x1xf32> -> vector<16x1xf32>
    %87 = vector.broadcast %86 : vector<16x1xf32> to vector<16x16xf32>
    %88 = arith.mulf %83, %87 : vector<16x16xf32>
    %89 = arith.truncf %88 : vector<16x16xf32> to vector<16x16xbf16>
    %cst_34 = arith.constant dense<0.000000e+00> : vector<16x8xf32>
    %90 = tpu.matmul %89, %75, %cst_34 {dimension_numbers = #tpu.dot_dimension_numbers<[1], [0], [0], [1], [0, 0, 1, 1], [], []>} : vector<16x16xbf16>, vector<16x8xbf16>, vector<16x8xf32> -> vector<16x8xf32>
    %91 = arith.truncf %90 : vector<16x8xf32> to vector<16x8xbf16>
    %c0_35 = arith.constant 0 : index
    %c8 = arith.constant 8 : index
    %92 = vector.load %arg11[%c0_35, %c8] : memref<16x32xbf16, #tpu.memory_space<vmem>>, vector<16x8xbf16>
    tpu.vector_store %arg11[%c0_35, %c8], %91 {strides = array<i32>} : memref<16x32xbf16, #tpu.memory_space<vmem>>, vector<16x8xbf16>,
    %93 = vector.extract_strided_slice %52 {offsets = [0, 16], sizes = [16, 8], strides = [1, 1]} : vector<16x96xbf16> to vector<16x8xbf16>
    %94 = vector.extract_strided_slice %52 {offsets = [0, 48], sizes = [16, 8], strides = [1, 1]} : vector<16x96xbf16> to vector<16x8xbf16>
    %95 = vector.extract_strided_slice %52 {offsets = [0, 80], sizes = [16, 8], strides = [1, 1]} : vector<16x96xbf16> to vector<16x8xbf16>
    %cst_36 = arith.constant dense<0.000000e+00> : vector<16x16xf32>
    %96 = tpu.matmul %93, %94, %cst_36 {dimension_numbers = #tpu.dot_dimension_numbers<[1], [1], [0], [0], [0, 0, 1, 0], [], []>} : vector<16x8xbf16>, vector<16x8xbf16>, vector<16x16xf32> -> vector<16x16xf32>
    %cst_37 = arith.constant -1.000000e+30 : f32
    %97 = vector.broadcast %cst_37 : f32 to vector<16x16xf32>
    %98 = arith.select %41, %96, %97 : vector<16x16xi1>, vector<16x16xf32>
    %cst_38 = arith.constant dense<0xFF800000> : vector<16xf32>
    %99 = vector.multi_reduction <maximumf>, %98, %cst_38 [1] : vector<16x16xf32> to vector<16xf32>
    %100 = vector.shape_cast %99 : vector<16xf32> to vector<16x1xf32>
    %101 = vector.broadcast %100 : vector<16x1xf32> to vector<16x16xf32>
    %102 = arith.subf %98, %101 : vector<16x16xf32>
    %103 = math.exp %102 : vector<16x16xf32>
    %cst_39 = arith.constant dense<0.000000e+00> : vector<16xf32>
    %104 = vector.multi_reduction <add>, %103, %cst_39 [1] : vector<16x16xf32> to vector<16xf32>
    %105 = vector.shape_cast %104 : vector<16xf32> to vector<16x1xf32>
    %106 = tpu.reciprocal %105 {approx = true} : vector<16x1xf32> -> vector<16x1xf32>
    %107 = vector.broadcast %106 : vector<16x1xf32> to vector<16x16xf32>
    %108 = arith.mulf %103, %107 : vector<16x16xf32>
    %109 = arith.truncf %108 : vector<16x16xf32> to vector<16x16xbf16>
    %cst_40 = arith.constant dense<0.000000e+00> : vector<16x8xf32>
    %110 = tpu.matmul %109, %95, %cst_40 {dimension_numbers = #tpu.dot_dimension_numbers<[1], [0], [0], [1], [0, 0, 1, 1], [], []>} : vector<16x16xbf16>, vector<16x8xbf16>, vector<16x8xf32> -> vector<16x8xf32>
    %111 = arith.truncf %110 : vector<16x8xf32> to vector<16x8xbf16>
    %c0_41 = arith.constant 0 : index
    %c16 = arith.constant 16 : index
    %112 = vector.load %arg11[%c0_41, %c16] : memref<16x32xbf16, #tpu.memory_space<vmem>>, vector<16x8xbf16>
    tpu.vector_store %arg11[%c0_41, %c16], %111 {strides = array<i32>} : memref<16x32xbf16, #tpu.memory_space<vmem>>, vector<16x8xbf16>,
    %113 = vector.extract_strided_slice %52 {offsets = [0, 24], sizes = [16, 8], strides = [1, 1]} : vector<16x96xbf16> to vector<16x8xbf16>
    %114 = vector.extract_strided_slice %52 {offsets = [0, 56], sizes = [16, 8], strides = [1, 1]} : vector<16x96xbf16> to vector<16x8xbf16>
    %115 = vector.extract_strided_slice %52 {offsets = [0, 88], sizes = [16, 8], strides = [1, 1]} : vector<16x96xbf16> to vector<16x8xbf16>
    %cst_42 = arith.constant dense<0.000000e+00> : vector<16x16xf32>
    %116 = tpu.matmul %113, %114, %cst_42 {dimension_numbers = #tpu.dot_dimension_numbers<[1], [1], [0], [0], [0, 0, 1, 0], [], []>} : vector<16x8xbf16>, vector<16x8xbf16>, vector<16x16xf32> -> vector<16x16xf32>
    %cst_43 = arith.constant -1.000000e+30 : f32
    %117 = vector.broadcast %cst_43 : f32 to vector<16x16xf32>
    %118 = arith.select %41, %116, %117 : vector<16x16xi1>, vector<16x16xf32>
    %cst_44 = arith.constant dense<0xFF800000> : vector<16xf32>
    %119 = vector.multi_reduction <maximumf>, %118, %cst_44 [1] : vector<16x16xf32> to vector<16xf32>
    %120 = vector.shape_cast %119 : vector<16xf32> to vector<16x1xf32>
    %121 = vector.broadcast %120 : vector<16x1xf32> to vector<16x16xf32>
    %122 = arith.subf %118, %121 : vector<16x16xf32>
    %123 = math.exp %122 : vector<16x16xf32>
    %cst_45 = arith.constant dense<0.000000e+00> : vector<16xf32>
    %124 = vector.multi_reduction <add>, %123, %cst_45 [1] : vector<16x16xf32> to vector<16xf32>
    %125 = vector.shape_cast %124 : vector<16xf32> to vector<16x1xf32>
    %126 = tpu.reciprocal %125 {approx = true} : vector<16x1xf32> -> vector<16x1xf32>
    %127 = vector.broadcast %126 : vector<16x1xf32> to vector<16x16xf32>
    %128 = arith.mulf %123, %127 : vector<16x16xf32>
    %129 = arith.truncf %128 : vector<16x16xf32> to vector<16x16xbf16>
    %cst_46 = arith.constant dense<0.000000e+00> : vector<16x8xf32>
    %130 = tpu.matmul %129, %115, %cst_46 {dimension_numbers = #tpu.dot_dimension_numbers<[1], [0], [0], [1], [0, 0, 1, 1], [], []>} : vector<16x16xbf16>, vector<16x8xbf16>, vector<16x8xf32> -> vector<16x8xf32>
    %131 = arith.truncf %130 : vector<16x8xf32> to vector<16x8xbf16>
    %c0_47 = arith.constant 0 : index
    %c24 = arith.constant 24 : index
    %132 = vector.load %arg11[%c0_47, %c24] : memref<16x32xbf16, #tpu.memory_space<vmem>>, vector<16x8xbf16>
    tpu.vector_store %arg11[%c0_47, %c24], %131 {strides = array<i32>} : memref<16x32xbf16, #tpu.memory_space<vmem>>, vector<16x8xbf16>,
    %c0_48 = arith.constant 0 : index
    %c0_49 = arith.constant 0 : index
    %133 = vector.load %arg10[%c0_48, %c0_49] : memref<16x32xf32, #tpu.memory_space<vmem>>, vector<16x32xf32>
    %c0_50 = arith.constant 0 : index
    %c0_51 = arith.constant 0 : index
    %134 = vector.load %arg11[%c0_50, %c0_51] : memref<16x32xbf16, #tpu.memory_space<vmem>>, vector<16x32xbf16>
    %135 = arith.index_cast %c0_i32 : i32 to index
    %c0_52 = arith.constant 0 : index
    %c0_53 = arith.constant 0 : index
    %136 = vector.load %arg6[%135, %c0_52, %c0_53] : memref<1x32x32xbf16, #tpu.memory_space<vmem>>, vector<1x32x32xbf16>
    %137 = vector.shape_cast %136 : vector<1x32x32xbf16> to vector<32x32xbf16>
    %cst_54 = arith.constant dense<0.000000e+00> : vector<16x32xf32>
    %138 = tpu.matmul %134, %137, %cst_54 {dimension_numbers = #tpu.dot_dimension_numbers<[1], [0], [0], [1], [0, 0, 1, 1], [], []>} : vector<16x32xbf16>, vector<32x32xbf16>, vector<16x32xf32> -> vector<16x32xf32>
    %139 = arith.addf %133, %138 : vector<16x32xf32>
    %c0_55 = arith.constant 0 : index
    %c0_56 = arith.constant 0 : index
    %140 = vector.load %arg10[%c0_55, %c0_56] : memref<16x32xf32, #tpu.memory_space<vmem>>, vector<16x32xf32>
    tpu.vector_store %arg10[%c0_55, %c0_56], %139 {strides = array<i32>} : memref<16x32xf32, #tpu.memory_space<vmem>>, vector<16x32xf32>,
    %c1_i32 = arith.constant 1 : i32
    %c0_57 = arith.constant 0 : index
    %c0_58 = arith.constant 0 : index
    %141 = vector.load %arg10[%c0_57, %c0_58] : memref<16x32xf32, #tpu.memory_space<vmem>>, vector<16x32xf32>
    %142 = arith.truncf %141 : vector<16x32xf32> to vector<16x32xbf16>
    %c0_59 = arith.constant 0 : index
    %c0_60 = arith.constant 0 : index
    %c0_61 = arith.constant 0 : index
    %143 = vector.load %arg8[%c0_59, %c0_60, %c0_61] : memref<1x16x32xbf16, #tpu.memory_space<vmem>>, vector<1x16x32xbf16>
    %144 = vector.shape_cast %143 : vector<1x16x32xbf16> to vector<16x32xbf16>
    %145 = vector.shape_cast %142 : vector<16x32xbf16> to vector<1x16x32xbf16>
    tpu.vector_store %arg8[%c0_59, %c0_60, %c0_61], %145 {strides = array<i32>} : memref<1x16x32xbf16, #tpu.memory_space<vmem>>, vector<1x16x32xbf16>,
    return
  }
  func.func @transform_0(%arg0: i32) -> (i32, i32, i32) {
    %c0_i32 = arith.constant 0 : i32
    %c0_i32_0 = arith.constant 0 : i32
    %c0_i32_1 = arith.constant 0 : i32
    return %arg0, %c0_i32, %c0_i32_0 : i32, i32, i32
  }
  func.func @transform_1(%arg0: i32) -> (i32, i32) {
    %c0_i32 = arith.constant 0 : i32
    %c0_i32_0 = arith.constant 0 : i32
    %c0_i32_1 = arith.constant 0 : i32
    return %c0_i32, %c0_i32_0 : i32, i32
  }
  func.func @transform_2(%arg0: i32) -> (i32, i32) {
    %c0_i32 = arith.constant 0 : i32
    %c0_i32_0 = arith.constant 0 : i32
    %c0_i32_1 = arith.constant 0 : i32
    return %c0_i32, %c0_i32_0 : i32, i32
  }
  func.func @transform_3(%arg0: i32) -> (i32, i32, i32) {
    %c0_i32 = arith.constant 0 : i32
    %c0_i32_0 = arith.constant 0 : i32
    %c0_i32_1 = arith.constant 0 : i32
    %c0_i32_2 = arith.constant 0 : i32
    return %c0_i32, %c0_i32_0, %c0_i32_1 : i32, i32, i32
  }
  func.func @transform_4(%arg0: i32) -> (i32, i32, i32) {
    %c0_i32 = arith.constant 0 : i32
    %c0_i32_0 = arith.constant 0 : i32
    %c0_i32_1 = arith.constant 0 : i32
    %c0_i32_2 = arith.constant 0 : i32
    return %c0_i32, %c0_i32_0, %c0_i32_1 : i32, i32, i32
  }
  func.func @transform_5(%arg0: i32) -> (i32, i32, i32) {
    %c0_i32 = arith.constant 0 : i32
    %c0_i32_0 = arith.constant 0 : i32
    %c0_i32_1 = arith.constant 0 : i32
    %c0_i32_2 = arith.constant 0 : i32
    return %c0_i32, %c0_i32_0, %c0_i32_1 : i32, i32, i32
  }
  func.func @transform_6(%arg0: i32) -> (i32, i32) {
    %c0_i32 = arith.constant 0 : i32
    %c0_i32_0 = arith.constant 0 : i32
    %c0_i32_1 = arith.constant 0 : i32
    return %c0_i32, %c0_i32_0 : i32, i32
  }
  func.func @transform_7(%arg0: i32) -> (i32, i32, i32) {
    %c0_i32 = arith.constant 0 : i32
    %c0_i32_0 = arith.constant 0 : i32
    %c0_i32_1 = arith.constant 0 : i32
    return %arg0, %c0_i32, %c0_i32_0 : i32, i32, i32
  }
}

</mosaic_0001>

<llo_original>
// kernel: tpu_custom_call.1
$region0: #{tpu_custom_call.1}
  #allocation0 [shape = 'u32[]', space=smem, size = 0x4, offset = 0x4, fixed_abs, tag = 'smem constant byte address 0x4 - core index']
  #allocation1 [shape = 'u32[144,128]{1,0:T(1,128)}', space=vmem, size = 0x12000, scoped, tag = 'internal scratch']
  #allocation2 [shape = 'bf16[16,32]{1,0:T(8,128)(2,1)}', space=vmem, size = 0x1000, scoped, tag = 'scratch operand']
  #allocation3 [shape = 'f32[16,32]{1,0:T(8,128)}', space=vmem, size = 0x2000, scoped, tag = 'scratch operand']
  #allocation4 [shape = 'bf16[16,32]{1,0:T(8,128)(2,1)}', space=vmem, size = 0x1000, scoped, tag = 'scratch operand']
  %s0 = inlined_call_operand.hbm [shape: bf16[2,16,32], index: 0, kind: input, shape index: {}]
  %s1 = inlined_call_operand.vmem [shape: f32[1,32], index: 1, kind: input, shape index: {}]
  %s2 = inlined_call_operand.vmem [shape: f32[1,32], index: 2, kind: input, shape index: {}]
  %s3 = inlined_call_operand.hbm [shape: bf16[1,32,96], index: 3, kind: input, shape index: {}]
  %s4 = inlined_call_operand.vmem [shape: f32[1,1,96], index: 4, kind: input, shape index: {}]
  %s5 = inlined_call_operand.hbm [shape: bf16[1,32,32], index: 5, kind: input, shape index: {}]
  %s6 = inlined_call_operand.vmem [shape: f32[1,32], index: 6, kind: input, shape index: {}]
  %s7 = inlined_call_operand.hbm [shape: bf16[2,16,32], index: 7, kind: output, shape index: {}]
  %s8 = sld [smem:[#allocation0]]
  $region73: #{tpu_custom_call.1} parent=0
    _
  %s10 = ssub.s32 1, %s8
  %s11 = scalar_select 0, %s10, %s8
  $region1: #{tpu_custom_call.1} parent=0
    #allocation5 [shape = 'u8[8192]{0}', space=vmem, size = 0x2000, scoped, tag = 'input window, operand 0']
    #allocation6 [shape = 's32[2]{0}', space=sflag, size = 0x8, scoped, tag = 'scoped memory for tpu_custom_call.1']
    #allocation7 [shape = 's32[2]{0}', space=sflag, size = 0x8, scoped, tag = 'scoped memory for tpu_custom_call.1']
    #allocation8 [shape = 'u8[8192]{0}', space=vmem, size = 0x2000, scoped, tag = 'input window, operand 3, single buffered']
    #allocation9 [shape = 's32[1]{0}', space=sflag, size = 0x4, scoped, tag = 'scoped memory for tpu_custom_call.1']
    #allocation10 [shape = 'u8[8192]{0}', space=vmem, size = 0x2000, scoped, tag = 'input window, operand 5, single buffered']
    #allocation11 [shape = 'u8[8192]{0}', space=vmem, size = 0x2000, scoped, tag = 'output window, operand 0']
    %12 = vsyncpa [#allocation6], 0
    %s13 = scalar_lea.sflag [#allocation6], 1
    %14 = vsyncpa %s13, 0
    %15 = vsyncpa [#allocation9], 0
    %16 = vsyncpa [#allocation7], 0
    %s17 = scalar_lea.sflag [#allocation7], 1
    %18 = vsyncpa %s17, 0
    loop: start=0, step=1, limit=4
    $region2: #{tpu_custom_call.1} parent=1 // loop_pre_header
      _
    $region3: #{tpu_custom_call.1} parent=1 // loop_header
      %s20 = sphi 0, %s24
      %p21 = scmp.ge.s32.totalorder %s20, 4
      %s30 = sphi 0, %s32
      %s33 = sphi 0, %s30
      %s34 = sphi 0, %s33
      %s50 = sphi 0, %s34
      %s54 = sphi 0, %s54
      %s56 = sphi 0, %s54
      %s57 = sphi 0, %s56
      %s71 = sphi 0, %s57
      %s75 = sphi 0, %s75
      %s77 = sphi 0, %s75
      %s78 = sphi 0, %s77
      %s92 = sphi 0, %s78
      %s96 = sphi 0, %s96
      %s98 = sphi 0, %s96
      %s99 = sphi 0, %s98
      %s113 = sphi 0, %s99
      %s117 = sphi 0, %s117
      %s119 = sphi 0, %s117
      %s120 = sphi 0, %s119
      %s134 = sphi 0, %s120
      %s138 = sphi 0, %s138
      %s140 = sphi 0, %s138
      %s141 = sphi 0, %s140
      %s155 = sphi 0, %s141
      %s159 = sphi 0, %s159
      %s161 = sphi 0, %s159
      %s162 = sphi 0, %s161
      %s176 = sphi 0, %s162
      %s182 = sphi 0, %s184
      %s185 = sphi 0, %s182
      %s186 = sphi 0, %s185
      %s202 = sphi 0, %s186
    $region4: #{tpu_custom_call.1} parent=1 // loop_header_branch
      %23 = sbr.rel (%p21) target = $region8
    $region5: #{tpu_custom_call.1} parent=1 // loop_body
      %s25 = ssub.s32 %s20, 1
      %s26 = ssub.s32 %s20, 2
      %s27 = sadd.s32 %s20, 1
      %s28 = ssub.s32 %s20, %s27
      %p29 = scmp.eq.s32.totalorder %s28, 0
      %s31 = sadd.s32 %s30, 1
      %s32 = scalar_select %p29, %s30, %s31
      %p35 = pneg %p29
      %p36 = scmp.eq.s32.totalorder %s20, 1
      %p37 = por %p35, %p36
      %p38 = scmp.ne.s32.totalorder %s30, %s33
      %p39 = scmp.eq.s32.totalorder %s20, 0
      %p40 = por %p38, %p39
      %p41 = scmp.ne.s32.totalorder %s30, %s33
      %p42 = scmp.eq.s32.totalorder %s25, 1
      %p43 = por %p41, %p42
      %p44 = scmp.ne.s32.totalorder %s33, %s34
      %p45 = scmp.eq.s32.totalorder %s25, 0
      %p46 = por %p44, %p45
      %p47 = scmp.ne.s32.totalorder %s33, %s34
      %p48 = scmp.eq.s32.totalorder %s26, 1
      %p49 = por %p47, %p48
      %p51 = scmp.ne.s32.totalorder %s34, %s50
      %p52 = scmp.eq.s32.totalorder %s26, 0
      %p53 = por %p51, %p52
      %s55 = sadd.s32 %s54, 1
      %p58 = scmp.eq.s32.totalorder %s20, 1
      %p59 = scmp.ne.s32.totalorder %s54, %s56
      %p60 = scmp.eq.s32.totalorder %s20, 0
      %p61 = por %p59, %p60
      %p62 = scmp.ne.s32.totalorder %s54, %s56
      %p63 = scmp.eq.s32.totalorder %s25, 1
      %p64 = por %p62, %p63
      %p65 = scmp.ne.s32.totalorder %s56, %s57
      %p66 = scmp.eq.s32.totalorder %s25, 0
      %p67 = por %p65, %p66
      %p68 = scmp.ne.s32.totalorder %s56, %s57
      %p69 = scmp.eq.s32.totalorder %s26, 1
      %p70 = por %p68, %p69
      %p72 = scmp.ne.s32.totalorder %s57, %s71
      %p73 = scmp.eq.s32.totalorder %s26, 0
      %p74 = por %p72, %p73
      %s76 = sadd.s32 %s75, 1
      %p79 = scmp.eq.s32.totalorder %s20, 1
      %p80 = scmp.ne.s32.totalorder %s75, %s77
      %p81 = scmp.eq.s32.totalorder %s20, 0
      %p82 = por %p80, %p81
      %p83 = scmp.ne.s32.totalorder %s75, %s77
      %p84 = scmp.eq.s32.totalorder %s25, 1
      %p85 = por %p83, %p84
      %p86 = scmp.ne.s32.totalorder %s77, %s78
      %p87 = scmp.eq.s32.totalorder %s25, 0
      %p88 = por %p86, %p87
      %p89 = scmp.ne.s32.totalorder %s77, %s78
      %p90 = scmp.eq.s32.totalorder %s26, 1
      %p91 = por %p89, %p90
      %p93 = scmp.ne.s32.totalorder %s78, %s92
      %p94 = scmp.eq.s32.totalorder %s26, 0
      %p95 = por %p93, %p94
      %s97 = sadd.s32 %s96, 1
      %p100 = scmp.eq.s32.totalorder %s20, 1
      %p101 = scmp.ne.s32.totalorder %s96, %s98
      %p102 = scmp.eq.s32.totalorder %s20, 0
      %p103 = por %p101, %p102
      %p104 = scmp.ne.s32.totalorder %s96, %s98
      %p105 = scmp.eq.s32.totalorder %s25, 1
      %p106 = por %p104, %p105
      %p107 = scmp.ne.s32.totalorder %s98, %s99
      %p108 = scmp.eq.s32.totalorder %s25, 0
      %p109 = por %p107, %p108
      %p110 = scmp.ne.s32.totalorder %s98, %s99
      %p111 = scmp.eq.s32.totalorder %s26, 1
      %p112 = por %p110, %p111
      %p114 = scmp.ne.s32.totalorder %s99, %s113
      %p115 = scmp.eq.s32.totalorder %s26, 0
      %p116 = por %p114, %p115
      %s118 = sadd.s32 %s117, 1
      %p121 = scmp.eq.s32.totalorder %s20, 1
      %p122 = scmp.ne.s32.totalorder %s117, %s119
      %p123 = scmp.eq.s32.totalorder %s20, 0
      %p124 = por %p122, %p123
      %p125 = scmp.ne.s32.totalorder %s117, %s119
      %p126 = scmp.eq.s32.totalorder %s25, 1
      %p127 = por %p125, %p126
      %p128 = scmp.ne.s32.totalorder %s119, %s120
      %p129 = scmp.eq.s32.totalorder %s25, 0
      %p130 = por %p128, %p129
      %p131 = scmp.ne.s32.totalorder %s119, %s120
      %p132 = scmp.eq.s32.totalorder %s26, 1
      %p133 = por %p131, %p132
      %p135 = scmp.ne.s32.totalorder %s120, %s134
      %p136 = scmp.eq.s32.totalorder %s26, 0
      %p137 = por %p135, %p136
      %s139 = sadd.s32 %s138, 1
      %p142 = scmp.eq.s32.totalorder %s20, 1
      %p143 = scmp.ne.s32.totalorder %s138, %s140
      %p144 = scmp.eq.s32.totalorder %s20, 0
      %p145 = por %p143, %p144
      %p146 = scmp.ne.s32.totalorder %s138, %s140
      %p147 = scmp.eq.s32.totalorder %s25, 1
      %p148 = por %p146, %p147
      %p149 = scmp.ne.s32.totalorder %s140, %s141
      %p150 = scmp.eq.s32.totalorder %s25, 0
      %p151 = por %p149, %p150
      %p152 = scmp.ne.s32.totalorder %s140, %s141
      %p153 = scmp.eq.s32.totalorder %s26, 1
      %p154 = por %p152, %p153
      %p156 = scmp.ne.s32.totalorder %s141, %s155
      %p157 = scmp.eq.s32.totalorder %s26, 0
      %p158 = por %p156, %p157
      %s160 = sadd.s32 %s159, 1
      %p163 = scmp.eq.s32.totalorder %s20, 1
      %p164 = scmp.ne.s32.totalorder %s159, %s161
      %p165 = scmp.eq.s32.totalorder %s20, 0
      %p166 = por %p164, %p165
      %p167 = scmp.ne.s32.totalorder %s159, %s161
      %p168 = scmp.eq.s32.totalorder %s25, 1
      %p169 = por %p167, %p168
      %p170 = scmp.ne.s32.totalorder %s161, %s162
      %p171 = scmp.eq.s32.totalorder %s25, 0
      %p172 = por %p170, %p171
      %p173 = scmp.ne.s32.totalorder %s161, %s162
      %p174 = scmp.eq.s32.totalorder %s26, 1
      %p175 = por %p173, %p174
      %p177 = scmp.ne.s32.totalorder %s162, %s176
      %p178 = scmp.eq.s32.totalorder %s26, 0
      %p179 = por %p177, %p178
      %s180 = ssub.s32 %s20, %s27
      %p181 = scmp.eq.s32.totalorder %s180, 0
      %s183 = sadd.s32 %s182, 1
      %s184 = scalar_select %p181, %s182, %s183
      %p187 = pneg %p181
      %p188 = scmp.eq.s32.totalorder %s20, 1
      %p189 = por %p187, %p188
      %p190 = scmp.ne.s32.totalorder %s182, %s185
      %p191 = scmp.eq.s32.totalorder %s20, 0
      %p192 = por %p190, %p191
      %p193 = scmp.ne.s32.totalorder %s182, %s185
      %p194 = scmp.eq.s32.totalorder %s25, 1
      %p195 = por %p193, %p194
      %p196 = scmp.ne.s32.totalorder %s185, %s186
      %p197 = scmp.eq.s32.totalorder %s25, 0
      %p198 = por %p196, %p197
      %p199 = scmp.ne.s32.totalorder %s185, %s186
      %p200 = scmp.eq.s32.totalorder %s26, 1
      %p201 = por %p199, %p200
      %p203 = scmp.ne.s32.totalorder %s186, %s202
      %p204 = scmp.eq.s32.totalorder %s26, 0
      %p205 = por %p203, %p204
      %p206 = scmp.le.s32.totalorder 1, %s20
      %p207 = scmp.lt.s32.totalorder %s20, 3
      %p208 = pnand %p206, %p207
      %p209 = pneg %p208
      // Predicated region
      $region9: #{tpu_custom_call.1} parent=5 // pred_check
        _
      $region10: #{tpu_custom_call.1} parent=5 // pred_check_branch
        %211 = sbr.rel (%p208) target = $region12
      $region11: #{tpu_custom_call.1} parent=5 // pred_region
        %s212 = ssub.s32 %s20, 1
        // Predicated region
        $region13: #{tpu_custom_call.1} parent=11 // pred_check
          %p213 = pneg %p67
        $region14: #{tpu_custom_call.1} parent=11 // pred_check_branch
          %215 = sbr.rel (%p213) target = $region16
        $region15: #{tpu_custom_call.1} parent=11 // pred_region
          _
        $region16: #{tpu_custom_call.1} parent=11 // pred_fallthru
          _
        // Predicated region
        $region17: #{tpu_custom_call.1} parent=11 // pred_check
          %p216 = pneg %p88
        $region18: #{tpu_custom_call.1} parent=11 // pred_check_branch
          %218 = sbr.rel (%p216) target = $region20
        $region19: #{tpu_custom_call.1} parent=11 // pred_region
          _
        $region20: #{tpu_custom_call.1} parent=11 // pred_fallthru
          _
        // Predicated region
        $region21: #{tpu_custom_call.1} parent=11 // pred_check
          %p219 = pneg %p109
        $region22: #{tpu_custom_call.1} parent=11 // pred_check_branch
          %221 = sbr.rel (%p219) target = $region24
        $region23: #{tpu_custom_call.1} parent=11 // pred_region
          %s223 = ssub.s32 256, 256
          %224 = vsyncadd [#allocation9], %s223
          %s225 = sshll.u32 [#allocation8], 4
          %s226 = int_to_ptr.vmem [resolvable:$true] %s225
          %231 = dma.hbm_to_vmem [thread:$0]  %s3, 256, %s226, [#allocation9], 64, 64, 4
        $region24: #{tpu_custom_call.1} parent=11 // pred_fallthru
          _
        // Predicated region
        $region25: #{tpu_custom_call.1} parent=11 // pred_check
          %p232 = pneg %p130
        $region26: #{tpu_custom_call.1} parent=11 // pred_check_branch
          %234 = sbr.rel (%p232) target = $region28
        $region27: #{tpu_custom_call.1} parent=11 // pred_region
          _
        $region28: #{tpu_custom_call.1} parent=11 // pred_fallthru
          _
        // Predicated region
        $region29: #{tpu_custom_call.1} parent=11 // pred_check
          %p235 = pneg %p151
        $region30: #{tpu_custom_call.1} parent=11 // pred_check_branch
          %237 = sbr.rel (%p235) target = $region32
        $region31: #{tpu_custom_call.1} parent=11 // pred_region
          %s239 = ssub.s32 256, 256
          %240 = vsyncadd [#allocation9], %s239
          %s241 = sshll.u32 [#allocation10], 4
          %s242 = int_to_ptr.vmem [resolvable:$true] %s241
          %247 = dma.hbm_to_vmem [thread:$0]  %s5, 256, %s242, [#allocation9], 64, 64, 4
        $region32: #{tpu_custom_call.1} parent=11 // pred_fallthru
          _
        // Predicated region
        $region33: #{tpu_custom_call.1} parent=11 // pred_check
          %p248 = pneg %p172
        $region34: #{tpu_custom_call.1} parent=11 // pred_check_branch
          %250 = sbr.rel (%p248) target = $region36
        $region35: #{tpu_custom_call.1} parent=11 // pred_region
          _
        $region36: #{tpu_custom_call.1} parent=11 // pred_fallthru
          _
      $region12: #{tpu_custom_call.1} parent=5 // pred_fallthru
        _
      %p251 = scmp.lt.s32.totalorder %s20, 2
      // Predicated region
      $region37: #{tpu_custom_call.1} parent=5 // pred_check
        %p252 = pneg %p251
      $region38: #{tpu_custom_call.1} parent=5 // pred_check_branch
        %254 = sbr.rel (%p252) target = $region40
      $region39: #{tpu_custom_call.1} parent=5 // pred_region
        // Predicated region
        $region41: #{tpu_custom_call.1} parent=39 // pred_check
          %p255 = pneg %p40
        $region42: #{tpu_custom_call.1} parent=39 // pred_check_branch
          %257 = sbr.rel (%p255) target = $region44
        $region43: #{tpu_custom_call.1} parent=39 // pred_region
          %s258 = sand.u32 %s30, 1
          %s259 = scalar_lea.sflag [#allocation6], %s258
          %s260 = sand.u32 %s30, 1
          %s261 = smul.addr %s260, 8
          %s262 = scalar_lea.vmem [#allocation5], %s261
          %s264 = ssub.s32 128, 128
          %265 = vsyncadd %s259, %s264
          %s266 = smul.addr %s20, 2
          %s267 = smul.addr %s266, 64
          %s268 = scalar_lea.hbm %s0, %s267
          %s269 = sshll.u32 %s262, 4
          %s270 = int_to_ptr.vmem [resolvable:$true] %s269
          %275 = dma.hbm_to_vmem [thread:$0]  %s268, 128, %s270, %s259, 64, 64, 4
        $region44: #{tpu_custom_call.1} parent=39 // pred_fallthru
          _
      $region40: #{tpu_custom_call.1} parent=5 // pred_fallthru
        _
      %p276 = scmp.le.s32.totalorder 1, %s20
      %p277 = scmp.lt.s32.totalorder %s20, 3
      %p278 = pnand %p276, %p277
      %p279 = pneg %p278
      // Predicated region
      $region45: #{tpu_custom_call.1} parent=5 // pred_check
        _
      $region46: #{tpu_custom_call.1} parent=5 // pred_check_branch
        %281 = sbr.rel (%p278) target = $region48
      $region47: #{tpu_custom_call.1} parent=5 // pred_region
        %s282 = ssub.s32 %s20, 1
        %s283 = sand.u32 %s33, 1
        %s284 = scalar_lea.sflag [#allocation6], %s283
        %s285 = sand.u32 %s33, 1
        %s286 = smul.addr %s285, 8
        %s287 = scalar_lea.vmem [#allocation5], %s286
        // Predicated region
        $region49: #{tpu_custom_call.1} parent=47 // pred_check
          %p288 = pneg %p46
        $region50: #{tpu_custom_call.1} parent=47 // pred_check_branch
          %290 = sbr.rel (%p288) target = $region52
        $region51: #{tpu_custom_call.1} parent=47 // pred_region
          %291 = dma.done %s284, 128
        $region52: #{tpu_custom_call.1} parent=47 // pred_fallthru
          _
        // Predicated region
        $region53: #{tpu_custom_call.1} parent=47 // pred_check
          %p292 = pneg %p109
        $region54: #{tpu_custom_call.1} parent=47 // pred_check_branch
          %294 = sbr.rel (%p292) target = $region56
        $region55: #{tpu_custom_call.1} parent=47 // pred_region
          %295 = dma.done [#allocation9], 256
        $region56: #{tpu_custom_call.1} parent=47 // pred_fallthru
          _
        // Predicated region
        $region57: #{tpu_custom_call.1} parent=47 // pred_check
          %p296 = pneg %p151
        $region58: #{tpu_custom_call.1} parent=47 // pred_check_branch
          %298 = sbr.rel (%p296) target = $region60
        $region59: #{tpu_custom_call.1} parent=47 // pred_region
          %299 = dma.done [#allocation9], 256
        $region60: #{tpu_custom_call.1} parent=47 // pred_fallthru
          _
        %s300 = sand.u32 %s33, 1
        %s301 = scalar_lea.sflag [#allocation6], %s300
        %s302 = sand.u32 %s33, 1
        %s303 = smul.addr %s302, 8
        %s304 = scalar_lea.vmem [#allocation5], %s303
        %p305 = pneg %p46
        %p306 = pneg %p43
        %p307 = pneg %p67
        %p308 = pneg %p64
        %p309 = pneg %p88
        %p310 = pneg %p85
        %p311 = pneg %p109
        %p312 = pneg %p106
        %p313 = pneg %p130
        %p314 = pneg %p127
        %p315 = pneg %p151
        %p316 = pneg %p148
        %p317 = pneg %p172
        %p318 = pneg %p169
        %p319 = pneg %p198
        %p320 = pneg %p195
        %s321 = sand.u32 %s185, 1
        %s322 = scalar_lea.sflag [#allocation7], %s321
        %s323 = sand.u32 %s185, 1
        %s324 = smul.addr %s323, 8
        %s325 = scalar_lea.vmem [#allocation11], %s324
        %v327 = vld [vmem:[%s287] sm:$0xf]
        %v328 = vld [vmem:[%s287 + $0x4] sm:$0xf]
        %v329 = vunpack.c.l.bf16 %v327
        %v330 = vunpack.c.l.bf16 %v328
        %vm331 = vcmask 261120
        %v332 = vsel %vm331, %v329, 0.0
        %333 = vadd.xlane.f32.xlu0 %v332
        %v334 = vpop.xlane.xlu0 %333
        %v335 = vsel %vm331, %v330, 0.0
        %336 = vadd.xlane.f32.xlu0 %v335
        %v337 = vpop.xlane.xlu0 %336
        %v338 = vrcp.pop 32.0
        %v339 = vmul.f32 %v334, %v338
        %v340 = vmul.f32 %v337, %v338
        %v341 = vsub.f32 %v329, %v339
        %v342 = vsub.f32 %v330, %v340
        %v343 = vmul.f32 %v341, %v341
        %v344 = vmul.f32 %v342, %v342
        %v345 = vsel %vm331, %v343, 0.0
        %346 = vadd.xlane.f32.xlu0 %v345
        %v347 = vpop.xlane.xlu0 %346
        %v348 = vsel %vm331, %v344, 0.0
        %349 = vadd.xlane.f32.xlu0 %v348
        %v350 = vpop.xlane.xlu0 %349
        %v351 = vmul.f32 %v347, %v338
        %v352 = vmul.f32 %v350, %v338
        %v353 = vadd.f32 %v351, 1e-05
        %v354 = vadd.f32 %v352, 1e-05
        %v355 = vrsqrt.pop %v353
        %v356 = vrsqrt.pop %v354
        %v357 = vmul.f32 %v341, %v355
        %v358 = vmul.f32 %v342, %v356
        %v359 = vld [vmem:[%s1] sm:$0x1]
        %v361 = vlaneseq
        %v362 = vshrl.u32 %v361, 7
        %v363 = vsub.s32 0, %v362
        %v364 = vrot.slane %v359, %v363
        %v366 = vmul.f32 %v357, %v364
        %v367 = vmul.f32 %v358, %v364
        %v368 = vld [vmem:[%s2] sm:$0x1]
        %v370 = vlaneseq
        %v371 = vshrl.u32 %v370, 7
        %v372 = vsub.s32 0, %v371
        %v373 = vrot.slane %v368, %v372
        %v375 = vadd.f32 %v366, %v373
        %v376 = vadd.f32 %v367, %v373
        %v377 = vpack.c.bf16 %v376, %v375
        %v379 = vunpack.c.l.b16 %v377
        %v380 = vunpack.c.h.b16 %v377
        %v381 = vpack.c.b16 %v379, %v379
        %v382 = vpack.c.b16 %v380, %v380
        %vm385 = vcmask 257024
        %386 = vst.msk [vmem:[#allocation2] sm:$0xf] %vm385, %v381
        %387 = vst.msk [vmem:[#allocation2 + $0x4] sm:$0xf] %vm385, %v382
        %v388 = vld [vmem:[%s6] sm:$0x1]
        %v390 = vlaneseq
        %v391 = vshrl.u32 %v390, 7
        %v392 = vsub.s32 0, %v391
        %v393 = vrot.slane %v388, %v392
        %v395 = vadd.f32 %v329, %v393
        %v396 = vadd.f32 %v330, %v393
        %397 = vst.msk [vmem:[#allocation3] sm:$0xff] %vm331, %v395
        %398 = vst.msk [vmem:[#allocation3 + $0x8] sm:$0xff] %vm331, %v396
        %v399 = vlaneseq
        %v400 = vand.u32 %v399, 127
        %vm401 = vcmp.lt.s32.totalorder %v400, 13
        %v402 = vld [vmem:[#allocation2] sm:$0xf]
        %v403 = vld [vmem:[#allocation2 + $0x4] sm:$0xf]
        %v404 = vld [vmem:[#allocation8] sm:$0xf]
        %v405 = vld [vmem:[#allocation8 + $0x4] sm:$0xf]
        %v406 = vld [vmem:[#allocation8 + $0x8] sm:$0xf]
        %v407 = vld [vmem:[#allocation8 + $0xc] sm:$0xf]
        %v408 = vld [vmem:[%s4] sm:$0x1]
        %v410 = vlaneseq
        %v411 = vshrl.u32 %v410, 7
        %v412 = vsub.s32 0, %v411
        %v413 = vrot.slane %v408, %v412
        %v417 = vunpack.c.l.b16 %v402
        %v418 = vunpack.c.l.b16 %v403
        %v419 = vpack.c.b16 %v418, %v417
        %v424 = vunpack.c.l.b16 %v404
        %v425 = vunpack.c.l.b16 %v405
        %v426 = vunpack.c.l.b16 %v406
        %v427 = vunpack.c.l.b16 %v407
        %v428 = vpack.c.b16 %v425, %v424
        %v429 = vpack.c.b16 %v427, %v426
        %v433 = vsel %vm331, %v419, 0
        %435 = vmatprep.subr.bf16.mxu0 0
        %436 = vmatpush1.bf16.msra.mxu0 0
        %437 = vmatprep.subr.bf16.mxu0 0
        %438 = vmatpush1.bf16.msra.mxu0 0
        %439 = vmatprep.subr.bf16.mxu0 0
        %440 = vmatpush1.bf16.msra.mxu0 0
        %441 = vmatprep.subr.bf16.mxu0 0
        %442 = vmatpush1.bf16.msra.mxu0 0
        %443 = vmatprep.subr.bf16.mxu0 0
        %444 = vmatpush1.bf16.msra.mxu0 0
        %445 = vmatprep.subr.bf16.mxu0 0
        %446 = vmatpush1.bf16.msra.mxu0 0
        %447 = vmatprep.subr.bf16.mxu0 0
        %448 = vmatpush1.bf16.msra.mxu0 %v429
        %449 = vmatprep.subr.bf16.mxu0 0
        %450 = vmatpush1.bf16.msra.mxu0 %v428
        %451 = vmatprep.subr.bf16.mxu0 0
        %452 = vmatpush2.bf16.msra.mxu0 0
        %453 = vmatprep.subr.bf16.mxu0 0
        %454 = vmatpush2.bf16.msra.mxu0 0
        %455 = vmatprep.subr.bf16.mxu0 0
        %456 = vmatpush2.bf16.msra.mxu0 0
        %457 = vmatprep.subr.bf16.mxu0 0
        %458 = vmatpush2.bf16.msra.mxu0 0
        %459 = vmatprep.subr.bf16.mxu0 0
        %460 = vmatpush2.bf16.msra.mxu0 0
        %461 = vmatprep.subr.bf16.mxu0 0
        %462 = vmatpush2.bf16.msra.mxu0 0
        %463 = vmatprep.subr.bf16.mxu0 0
        %464 = vmatpush2.bf16.msra.mxu0 0
        %465 = vmatprep.subr.bf16.mxu0 0
        %466 = vmatpush2.bf16.msra.mxu0 0
        %467 = vmatprep.mubr.bf16.mxu0 0
        %468 = vmatmul.mubr.bf16.gmra.mxu0 %v433
        %v469 = vpop.f32.mrf.mxu0
        %v470 = vadd.f32 %v413, %v469
        %v471 = vpop.f32.mrf.mxu0
        %v472 = vpop.f32.mrf.mxu0
        %v473 = vadd.f32 %v413, %v472
        %v474 = vpop.f32.mrf.mxu0
        %475 = vdwg.mxu0
        %v476 = vpack.c.bf16 %v473, %v470
        %478 = vrot.lane.b32.xlu0 %v476, 96
        %v479 = vpop.permute.xlu0 %478
        %vm480 = vcmask 64512
        %v482 = vsel %vm480, %v476, 0
        %v485 = vsel %vm480, %v479, 0
        %487 = vmatprep.subr.bf16.mxu0 0
        %488 = vmatpush1.bf16.xpose.msra.mxu0 0
        %489 = vmatprep.subr.bf16.mxu0 0
        %490 = vmatpush1.bf16.xpose.msra.mxu0 0
        %491 = vmatprep.subr.bf16.mxu0 0
        %492 = vmatpush1.bf16.xpose.msra.mxu0 0
        %493 = vmatprep.subr.bf16.mxu0 0
        %494 = vmatpush1.bf16.xpose.msra.mxu0 0
        %495 = vmatprep.subr.bf16.mxu0 0
        %496 = vmatpush1.bf16.xpose.msra.mxu0 0
        %497 = vmatprep.subr.bf16.mxu0 0
        %498 = vmatpush1.bf16.xpose.msra.mxu0 0
        %499 = vmatprep.subr.bf16.mxu0 0
        %500 = vmatpush1.bf16.xpose.msra.mxu0 0
        %501 = vmatprep.subr.bf16.mxu0 0
        %502 = vmatpush1.bf16.xpose.msra.mxu0 %v485
        %503 = vmatprep.subr.bf16.mxu0 0
        %504 = vmatpush2.bf16.xpose.msra.mxu0 0
        %505 = vmatprep.subr.bf16.mxu0 0
        %506 = vmatpush2.bf16.xpose.msra.mxu0 0
        %507 = vmatprep.subr.bf16.mxu0 0
        %508 = vmatpush2.bf16.xpose.msra.mxu0 0
        %509 = vmatprep.subr.bf16.mxu0 0
        %510 = vmatpush2.bf16.xpose.msra.mxu0 0
        %511 = vmatprep.subr.bf16.mxu0 0
        %512 = vmatpush2.bf16.xpose.msra.mxu0 0
        %513 = vmatprep.subr.bf16.mxu0 0
        %514 = vmatpush2.bf16.xpose.msra.mxu0 0
        %515 = vmatprep.subr.bf16.mxu0 0
        %516 = vmatpush2.bf16.xpose.msra.mxu0 0
        %517 = vmatprep.subr.bf16.mxu0 0
        %518 = vmatpush2.bf16.xpose.msra.mxu0 0
        %519 = vmatprep.mubr.bf16.mxu0 0
        %520 = vmatmul.mubr.bf16.gmra.mxu0 %v482
        %v521 = vpop.f32.mrf.mxu0
        %v522 = vadd.f32 0.0, %v521
        %v523 = vpop.f32.mrf.mxu0
        %v524 = vpop.f32.mrf.mxu0
        %v525 = vadd.f32 0.0, %v524
        %v526 = vpop.f32.mrf.mxu0
        %527 = vdwg.mxu0
        %v528 = vsel %vm401, %v522, -1e+30
        %v529 = vsel %vm401, %v525, -1e+30
        %vm530 = vcmask 130048
        %v531 = vsel %vm530, %v528, -inf
        %532 = vmax.xlane.f32.xlu0 %v531
        %v533 = vpop.xlane.xlu0 %532
        %v534 = vsel %vm530, %v529, -inf
        %535 = vmax.xlane.f32.xlu0 %v534
        %v536 = vpop.xlane.xlu0 %535
        %v537 = vsub.f32 %v528, %v533
        %v538 = vsub.f32 %v529, %v536
        %v539 = vmul.f32 %v537, 1.442695
        %v540 = vpow.pop %v539
        %v541 = vmul.f32 %v538, 1.442695
        %v542 = vpow.pop %v541
        %v543 = vsel %vm530, %v540, 0.0
        %544 = vadd.xlane.f32.xlu0 %v543
        %v545 = vpop.xlane.xlu0 %544
        %v546 = vsel %vm530, %v542, 0.0
        %547 = vadd.xlane.f32.xlu0 %v546
        %v548 = vpop.xlane.xlu0 %547
        %v549 = vrcp.pop %v545
        %v550 = vrcp.pop %v548
        %v551 = vmul.f32 %v540, %v549
        %v552 = vmul.f32 %v542, %v550
        %v553 = vpack.c.bf16 %v552, %v551
        %554 = vrot.lane.b32.xlu0 %v476, 64
        %v555 = vpop.permute.xlu0 %554
        %v558 = vsel %vm530, %v553, 0
        %560 = vmatprep.subr.bf16.mxu0 0
        %561 = vmatpush1.bf16.msra.mxu0 0
        %562 = vmatprep.subr.bf16.mxu0 0
        %563 = vmatpush1.bf16.msra.mxu0 0
        %564 = vmatprep.subr.bf16.mxu0 0
        %565 = vmatpush1.bf16.msra.mxu0 0
        %566 = vmatprep.subr.bf16.mxu0 0
        %567 = vmatpush1.bf16.msra.mxu0 0
        %568 = vmatprep.subr.bf16.mxu0 0
        %569 = vmatpush1.bf16.msra.mxu0 0
        %570 = vmatprep.subr.bf16.mxu0 0
        %571 = vmatpush1.bf16.msra.mxu0 0
        %572 = vmatprep.subr.bf16.mxu0 0
        %573 = vmatpush1.bf16.msra.mxu0 0
        %574 = vmatprep.subr.bf16.mxu0 0
        %575 = vmatpush1.bf16.msra.mxu0 %v555
        %576 = vmatprep.subr.bf16.mxu0 0
        %577 = vmatpush2.bf16.msra.mxu0 0
        %578 = vmatprep.subr.bf16.mxu0 0
        %579 = vmatpush2.bf16.msra.mxu0 0
        %580 = vmatprep.subr.bf16.mxu0 0
        %581 = vmatpush2.bf16.msra.mxu0 0
        %582 = vmatprep.subr.bf16.mxu0 0
        %583 = vmatpush2.bf16.msra.mxu0 0
        %584 = vmatprep.subr.bf16.mxu0 0
        %585 = vmatpush2.bf16.msra.mxu0 0
        %586 = vmatprep.subr.bf16.mxu0 0
        %587 = vmatpush2.bf16.msra.mxu0 0
        %588 = vmatprep.subr.bf16.mxu0 0
        %589 = vmatpush2.bf16.msra.mxu0 0
        %590 = vmatprep.subr.bf16.mxu0 0
        %591 = vmatpush2.bf16.msra.mxu0 0
        %592 = vmatprep.mubr.bf16.mxu0 0
        %593 = vmatmul.mubr.bf16.gmra.mxu0 %v558
        %v594 = vpop.f32.mrf.mxu0
        %v595 = vadd.f32 0.0, %v594
        %v596 = vpop.f32.mrf.mxu0
        %v597 = vpop.f32.mrf.mxu0
        %v598 = vadd.f32 0.0, %v597
        %v599 = vpop.f32.mrf.mxu0
        %600 = vdwg.mxu0
        %v601 = vpack.c.bf16 %v598, %v595
        %v603 = vunpack.c.l.b16 %v601
        %v604 = vunpack.c.h.b16 %v601
        %v605 = vpack.c.b16 %v603, %v603
        %v606 = vpack.c.b16 %v604, %v604
        %vm609 = vcmask 60416
        %610 = vst.msk [vmem:[#allocation4] sm:$0xf] %vm609, %v605
        %611 = vst.msk [vmem:[#allocation4 + $0x4] sm:$0xf] %vm609, %v606
        %612 = vrot.lane.b32.xlu0 %v476, 120
        %v613 = vpop.permute.xlu0 %612
        %614 = vrot.lane.b32.xlu0 %v476, 88
        %v615 = vpop.permute.xlu0 %614
        %v617 = vsel %vm480, %v613, 0
        %v620 = vsel %vm480, %v615, 0
        %622 = vmatprep.subr.bf16.mxu0 0
        %623 = vmatpush1.bf16.xpose.msra.mxu0 0
        %624 = vmatprep.subr.bf16.mxu0 0
        %625 = vmatpush1.bf16.xpose.msra.mxu0 0
        %626 = vmatprep.subr.bf16.mxu0 0
        %627 = vmatpush1.bf16.xpose.msra.mxu0 0
        %628 = vmatprep.subr.bf16.mxu0 0
        %629 = vmatpush1.bf16.xpose.msra.mxu0 0
        %630 = vmatprep.subr.bf16.mxu0 0
        %631 = vmatpush1.bf16.xpose.msra.mxu0 0
        %632 = vmatprep.subr.bf16.mxu0 0
        %633 = vmatpush1.bf16.xpose.msra.mxu0 0
        %634 = vmatprep.subr.bf16.mxu0 0
        %635 = vmatpush1.bf16.xpose.msra.mxu0 0
        %636 = vmatprep.subr.bf16.mxu0 0
        %637 = vmatpush1.bf16.xpose.msra.mxu0 %v620
        %638 = vmatprep.subr.bf16.mxu0 0
        %639 = vmatpush2.bf16.xpose.msra.mxu0 0
        %640 = vmatprep.subr.bf16.mxu0 0
        %641 = vmatpush2.bf16.xpose.msra.mxu0 0
        %642 = vmatprep.subr.bf16.mxu0 0
        %643 = vmatpush2.bf16.xpose.msra.mxu0 0
        %644 = vmatprep.subr.bf16.mxu0 0
        %645 = vmatpush2.bf16.xpose.msra.mxu0 0
        %646 = vmatprep.subr.bf16.mxu0 0
        %647 = vmatpush2.bf16.xpose.msra.mxu0 0
        %648 = vmatprep.subr.bf16.mxu0 0
        %649 = vmatpush2.bf16.xpose.msra.mxu0 0
        %650 = vmatprep.subr.bf16.mxu0 0
        %651 = vmatpush2.bf16.xpose.msra.mxu0 0
        %652 = vmatprep.subr.bf16.mxu0 0
        %653 = vmatpush2.bf16.xpose.msra.mxu0 0
        %654 = vmatprep.mubr.bf16.mxu0 0
        %655 = vmatmul.mubr.bf16.gmra.mxu0 %v617
        %v656 = vpop.f32.mrf.mxu0
        %v657 = vadd.f32 0.0, %v656
        %v658 = vpop.f32.mrf.mxu0
        %v659 = vpop.f32.mrf.mxu0
        %v660 = vadd.f32 0.0, %v659
        %v661 = vpop.f32.mrf.mxu0
        %662 = vdwg.mxu0
        %v663 = vsel %vm401, %v657, -1e+30
        %v664 = vsel %vm401, %v660, -1e+30
        %v665 = vsel %vm530, %v663, -inf
        %666 = vmax.xlane.f32.xlu0 %v665
        %v667 = vpop.xlane.xlu0 %666
        %v668 = vsel %vm530, %v664, -inf
        %669 = vmax.xlane.f32.xlu0 %v668
        %v670 = vpop.xlane.xlu0 %669
        %v671 = vsub.f32 %v663, %v667
        %v672 = vsub.f32 %v664, %v670
        %v673 = vmul.f32 %v671, 1.442695
        %v674 = vpow.pop %v673
        %v675 = vmul.f32 %v672, 1.442695
        %v676 = vpow.pop %v675
        %v677 = vsel %vm530, %v674, 0.0
        %678 = vadd.xlane.f32.xlu0 %v677
        %v679 = vpop.xlane.xlu0 %678
        %v680 = vsel %vm530, %v676, 0.0
        %681 = vadd.xlane.f32.xlu0 %v680
        %v682 = vpop.xlane.xlu0 %681
        %v683 = vrcp.pop %v679
        %v684 = vrcp.pop %v682
        %v685 = vmul.f32 %v674, %v683
        %v686 = vmul.f32 %v676, %v684
        %v687 = vpack.c.bf16 %v686, %v685
        %688 = vrot.lane.b32.xlu0 %v476, 56
        %v689 = vpop.permute.xlu0 %688
        %v692 = vsel %vm530, %v687, 0
        %694 = vmatprep.subr.bf16.mxu0 0
        %695 = vmatpush1.bf16.msra.mxu0 0
        %696 = vmatprep.subr.bf16.mxu0 0
        %697 = vmatpush1.bf16.msra.mxu0 0
        %698 = vmatprep.subr.bf16.mxu0 0
        %699 = vmatpush1.bf16.msra.mxu0 0
        %700 = vmatprep.subr.bf16.mxu0 0
        %701 = vmatpush1.bf16.msra.mxu0 0
        %702 = vmatprep.subr.bf16.mxu0 0
        %703 = vmatpush1.bf16.msra.mxu0 0
        %704 = vmatprep.subr.bf16.mxu0 0
        %705 = vmatpush1.bf16.msra.mxu0 0
        %706 = vmatprep.subr.bf16.mxu0 0
        %707 = vmatpush1.bf16.msra.mxu0 0
        %708 = vmatprep.subr.bf16.mxu0 0
        %709 = vmatpush1.bf16.msra.mxu0 %v689
        %710 = vmatprep.subr.bf16.mxu0 0
        %711 = vmatpush2.bf16.msra.mxu0 0
        %712 = vmatprep.subr.bf16.mxu0 0
        %713 = vmatpush2.bf16.msra.mxu0 0
        %714 = vmatprep.subr.bf16.mxu0 0
        %715 = vmatpush2.bf16.msra.mxu0 0
        %716 = vmatprep.subr.bf16.mxu0 0
        %717 = vmatpush2.bf16.msra.mxu0 0
        %718 = vmatprep.subr.bf16.mxu0 0
        %719 = vmatpush2.bf16.msra.mxu0 0
        %720 = vmatprep.subr.bf16.mxu0 0
        %721 = vmatpush2.bf16.msra.mxu0 0
        %722 = vmatprep.subr.bf16.mxu0 0
        %723 = vmatpush2.bf16.msra.mxu0 0
        %724 = vmatprep.subr.bf16.mxu0 0
        %725 = vmatpush2.bf16.msra.mxu0 0
        %726 = vmatprep.mubr.bf16.mxu0 0
        %727 = vmatmul.mubr.bf16.gmra.mxu0 %v692
        %v728 = vpop.f32.mrf.mxu0
        %v729 = vadd.f32 0.0, %v728
        %v730 = vpop.f32.mrf.mxu0
        %v731 = vpop.f32.mrf.mxu0
        %v732 = vadd.f32 0.0, %v731
        %v733 = vpop.f32.mrf.mxu0
        %734 = vdwg.mxu0
        %v735 = vpack.c.bf16 %v732, %v729
        %v737 = vunpack.c.l.b16 %v735
        %v738 = vunpack.c.h.b16 %v735
        %v739 = vpack.c.b16 %v737, %v737
        %v740 = vpack.c.b16 %v738, %v738
        %741 = vrot.lane.b32.xlu0 %v739, 8
        %v742 = vpop.permute.xlu0 %741
        %743 = vrot.lane.b32.xlu0 %v740, 8
        %v744 = vpop.permute.xlu0 %743
        %vm747 = vcmask 126016
        %748 = vst.msk [vmem:[#allocation4] sm:$0xf] %vm747, %v742
        %749 = vst.msk [vmem:[#allocation4 + $0x4] sm:$0xf] %vm747, %v744
        %750 = vrot.lane.b32.xlu0 %v476, 112
        %v751 = vpop.permute.xlu0 %750
        %752 = vrot.lane.b32.xlu0 %v476, 80
        %v753 = vpop.permute.xlu0 %752
        %v755 = vsel %vm480, %v751, 0
        %v758 = vsel %vm480, %v753, 0
        %760 = vmatprep.subr.bf16.mxu0 0
        %761 = vmatpush1.bf16.xpose.msra.mxu0 0
        %762 = vmatprep.subr.bf16.mxu0 0
        %763 = vmatpush1.bf16.xpose.msra.mxu0 0
        %764 = vmatprep.subr.bf16.mxu0 0
        %765 = vmatpush1.bf16.xpose.msra.mxu0 0
        %766 = vmatprep.subr.bf16.mxu0 0
        %767 = vmatpush1.bf16.xpose.msra.mxu0 0
        %768 = vmatprep.subr.bf16.mxu0 0
        %769 = vmatpush1.bf16.xpose.msra.mxu0 0
        %770 = vmatprep.subr.bf16.mxu0 0
        %771 = vmatpush1.bf16.xpose.msra.mxu0 0
        %772 = vmatprep.subr.bf16.mxu0 0
        %773 = vmatpush1.bf16.xpose.msra.mxu0 0
        %774 = vmatprep.subr.bf16.mxu0 0
        %775 = vmatpush1.bf16.xpose.msra.mxu0 %v758
        %776 = vmatprep.subr.bf16.mxu0 0
        %777 = vmatpush2.bf16.xpose.msra.mxu0 0
        %778 = vmatprep.subr.bf16.mxu0 0
        %779 = vmatpush2.bf16.xpose.msra.mxu0 0
        %780 = vmatprep.subr.bf16.mxu0 0
        %781 = vmatpush2.bf16.xpose.msra.mxu0 0
        %782 = vmatprep.subr.bf16.mxu0 0
        %783 = vmatpush2.bf16.xpose.msra.mxu0 0
        %784 = vmatprep.subr.bf16.mxu0 0
        %785 = vmatpush2.bf16.xpose.msra.mxu0 0
        %786 = vmatprep.subr.bf16.mxu0 0
        %787 = vmatpush2.bf16.xpose.msra.mxu0 0
        %788 = vmatprep.subr.bf16.mxu0 0
        %789 = vmatpush2.bf16.xpose.msra.mxu0 0
        %790 = vmatprep.subr.bf16.mxu0 0
        %791 = vmatpush2.bf16.xpose.msra.mxu0 0
        %792 = vmatprep.mubr.bf16.mxu0 0
        %793 = vmatmul.mubr.bf16.gmra.mxu0 %v755
        %v794 = vpop.f32.mrf.mxu0
        %v795 = vadd.f32 0.0, %v794
        %v796 = vpop.f32.mrf.mxu0
        %v797 = vpop.f32.mrf.mxu0
        %v798 = vadd.f32 0.0, %v797
        %v799 = vpop.f32.mrf.mxu0
        %800 = vdwg.mxu0
        %v801 = vsel %vm401, %v795, -1e+30
        %v802 = vsel %vm401, %v798, -1e+30
        %v803 = vsel %vm530, %v801, -inf
        %804 = vmax.xlane.f32.xlu0 %v803
        %v805 = vpop.xlane.xlu0 %804
        %v806 = vsel %vm530, %v802, -inf
        %807 = vmax.xlane.f32.xlu0 %v806
        %v808 = vpop.xlane.xlu0 %807
        %v809 = vsub.f32 %v801, %v805
        %v810 = vsub.f32 %v802, %v808
        %v811 = vmul.f32 %v809, 1.442695
        %v812 = vpow.pop %v811
        %v813 = vmul.f32 %v810, 1.442695
        %v814 = vpow.pop %v813
        %v815 = vsel %vm530, %v812, 0.0
        %816 = vadd.xlane.f32.xlu0 %v815
        %v817 = vpop.xlane.xlu0 %816
        %v818 = vsel %vm530, %v814, 0.0
        %819 = vadd.xlane.f32.xlu0 %v818
        %v820 = vpop.xlane.xlu0 %819
        %v821 = vrcp.pop %v817
        %v822 = vrcp.pop %v820
        %v823 = vmul.f32 %v812, %v821
        %v824 = vmul.f32 %v814, %v822
        %v825 = vpack.c.bf16 %v824, %v823
        %826 = vrot.lane.b32.xlu0 %v476, 48
        %v827 = vpop.permute.xlu0 %826
        %v830 = vsel %vm530, %v825, 0
        %832 = vmatprep.subr.bf16.mxu0 0
        %833 = vmatpush1.bf16.msra.mxu0 0
        %834 = vmatprep.subr.bf16.mxu0 0
        %835 = vmatpush1.bf16.msra.mxu0 0
        %836 = vmatprep.subr.bf16.mxu0 0
        %837 = vmatpush1.bf16.msra.mxu0 0
        %838 = vmatprep.subr.bf16.mxu0 0
        %839 = vmatpush1.bf16.msra.mxu0 0
        %840 = vmatprep.subr.bf16.mxu0 0
        %841 = vmatpush1.bf16.msra.mxu0 0
        %842 = vmatprep.subr.bf16.mxu0 0
        %843 = vmatpush1.bf16.msra.mxu0 0
        %844 = vmatprep.subr.bf16.mxu0 0
        %845 = vmatpush1.bf16.msra.mxu0 0
        %846 = vmatprep.subr.bf16.mxu0 0
        %847 = vmatpush1.bf16.msra.mxu0 %v827
        %848 = vmatprep.subr.bf16.mxu0 0
        %849 = vmatpush2.bf16.msra.mxu0 0
        %850 = vmatprep.subr.bf16.mxu0 0
        %851 = vmatpush2.bf16.msra.mxu0 0
        %852 = vmatprep.subr.bf16.mxu0 0
        %853 = vmatpush2.bf16.msra.mxu0 0
        %854 = vmatprep.subr.bf16.mxu0 0
        %855 = vmatpush2.bf16.msra.mxu0 0
        %856 = vmatprep.subr.bf16.mxu0 0
        %857 = vmatpush2.bf16.msra.mxu0 0
        %858 = vmatprep.subr.bf16.mxu0 0
        %859 = vmatpush2.bf16.msra.mxu0 0
        %860 = vmatprep.subr.bf16.mxu0 0
        %861 = vmatpush2.bf16.msra.mxu0 0
        %862 = vmatprep.subr.bf16.mxu0 0
        %863 = vmatpush2.bf16.msra.mxu0 0
        %864 = vmatprep.mubr.bf16.mxu0 0
        %865 = vmatmul.mubr.bf16.gmra.mxu0 %v830
        %v866 = vpop.f32.mrf.mxu0
        %v867 = vadd.f32 0.0, %v866
        %v868 = vpop.f32.mrf.mxu0
        %v869 = vpop.f32.mrf.mxu0
        %v870 = vadd.f32 0.0, %v869
        %v871 = vpop.f32.mrf.mxu0
        %872 = vdwg.mxu0
        %v873 = vpack.c.bf16 %v870, %v867
        %v875 = vunpack.c.l.b16 %v873
        %v876 = vunpack.c.h.b16 %v873
        %v877 = vpack.c.b16 %v875, %v875
        %v878 = vpack.c.b16 %v876, %v876
        %879 = vrot.lane.b32.xlu0 %v877, 16
        %v880 = vpop.permute.xlu0 %879
        %881 = vrot.lane.b32.xlu0 %v878, 16
        %v882 = vpop.permute.xlu0 %881
        %vm885 = vcmask 191616
        %886 = vst.msk [vmem:[#allocation4] sm:$0xf] %vm885, %v880
        %887 = vst.msk [vmem:[#allocation4 + $0x4] sm:$0xf] %vm885, %v882
        %888 = vrot.lane.b32.xlu0 %v476, 104
        %v889 = vpop.permute.xlu0 %888
        %890 = vrot.lane.b32.xlu0 %v476, 72
        %v891 = vpop.permute.xlu0 %890
        %v893 = vsel %vm480, %v889, 0
        %v896 = vsel %vm480, %v891, 0
        %898 = vmatprep.subr.bf16.mxu0 0
        %899 = vmatpush1.bf16.xpose.msra.mxu0 0
        %900 = vmatprep.subr.bf16.mxu0 0
        %901 = vmatpush1.bf16.xpose.msra.mxu0 0
        %902 = vmatprep.subr.bf16.mxu0 0
        %903 = vmatpush1.bf16.xpose.msra.mxu0 0
        %904 = vmatprep.subr.bf16.mxu0 0
        %905 = vmatpush1.bf16.xpose.msra.mxu0 0
        %906 = vmatprep.subr.bf16.mxu0 0
        %907 = vmatpush1.bf16.xpose.msra.mxu0 0
        %908 = vmatprep.subr.bf16.mxu0 0
        %909 = vmatpush1.bf16.xpose.msra.mxu0 0
        %910 = vmatprep.subr.bf16.mxu0 0
        %911 = vmatpush1.bf16.xpose.msra.mxu0 0
        %912 = vmatprep.subr.bf16.mxu0 0
        %913 = vmatpush1.bf16.xpose.msra.mxu0 %v896
        %914 = vmatprep.subr.bf16.mxu0 0
        %915 = vmatpush2.bf16.xpose.msra.mxu0 0
        %916 = vmatprep.subr.bf16.mxu0 0
        %917 = vmatpush2.bf16.xpose.msra.mxu0 0
        %918 = vmatprep.subr.bf16.mxu0 0
        %919 = vmatpush2.bf16.xpose.msra.mxu0 0
        %920 = vmatprep.subr.bf16.mxu0 0
        %921 = vmatpush2.bf16.xpose.msra.mxu0 0
        %922 = vmatprep.subr.bf16.mxu0 0
        %923 = vmatpush2.bf16.xpose.msra.mxu0 0
        %924 = vmatprep.subr.bf16.mxu0 0
        %925 = vmatpush2.bf16.xpose.msra.mxu0 0
        %926 = vmatprep.subr.bf16.mxu0 0
        %927 = vmatpush2.bf16.xpose.msra.mxu0 0
        %928 = vmatprep.subr.bf16.mxu0 0
        %929 = vmatpush2.bf16.xpose.msra.mxu0 0
        %930 = vmatprep.mubr.bf16.mxu0 0
        %931 = vmatmul.mubr.bf16.gmra.mxu0 %v893
        %v932 = vpop.f32.mrf.mxu0
        %v933 = vadd.f32 0.0, %v932
        %v934 = vpop.f32.mrf.mxu0
        %v935 = vpop.f32.mrf.mxu0
        %v936 = vadd.f32 0.0, %v935
        %v937 = vpop.f32.mrf.mxu0
        %938 = vdwg.mxu0
        %v939 = vsel %vm401, %v933, -1e+30
        %v940 = vsel %vm401, %v936, -1e+30
        %v941 = vsel %vm530, %v939, -inf
        %942 = vmax.xlane.f32.xlu0 %v941
        %v943 = vpop.xlane.xlu0 %942
        %v944 = vsel %vm530, %v940, -inf
        %945 = vmax.xlane.f32.xlu0 %v944
        %v946 = vpop.xlane.xlu0 %945
        %v947 = vsub.f32 %v939, %v943
        %v948 = vsub.f32 %v940, %v946
        %v949 = vmul.f32 %v947, 1.442695
        %v950 = vpow.pop %v949
        %v951 = vmul.f32 %v948, 1.442695
        %v952 = vpow.pop %v951
        %v953 = vsel %vm530, %v950, 0.0
        %954 = vadd.xlane.f32.xlu0 %v953
        %v955 = vpop.xlane.xlu0 %954
        %v956 = vsel %vm530, %v952, 0.0
        %957 = vadd.xlane.f32.xlu0 %v956
        %v958 = vpop.xlane.xlu0 %957
        %v959 = vrcp.pop %v955
        %v960 = vrcp.pop %v958
        %v961 = vmul.f32 %v950, %v959
        %v962 = vmul.f32 %v952, %v960
        %v963 = vpack.c.bf16 %v962, %v961
        %964 = vrot.lane.b32.xlu0 %v476, 40
        %v965 = vpop.permute.xlu0 %964
        %v968 = vsel %vm530, %v963, 0
        %970 = vmatprep.subr.bf16.mxu0 0
        %971 = vmatpush1.bf16.msra.mxu0 0
        %972 = vmatprep.subr.bf16.mxu0 0
        %973 = vmatpush1.bf16.msra.mxu0 0
        %974 = vmatprep.subr.bf16.mxu0 0
        %975 = vmatpush1.bf16.msra.mxu0 0
        %976 = vmatprep.subr.bf16.mxu0 0
        %977 = vmatpush1.bf16.msra.mxu0 0
        %978 = vmatprep.subr.bf16.mxu0 0
        %979 = vmatpush1.bf16.msra.mxu0 0
        %980 = vmatprep.subr.bf16.mxu0 0
        %981 = vmatpush1.bf16.msra.mxu0 0
        %982 = vmatprep.subr.bf16.mxu0 0
        %983 = vmatpush1.bf16.msra.mxu0 0
        %984 = vmatprep.subr.bf16.mxu0 0
        %985 = vmatpush1.bf16.msra.mxu0 %v965
        %986 = vmatprep.subr.bf16.mxu0 0
        %987 = vmatpush2.bf16.msra.mxu0 0
        %988 = vmatprep.subr.bf16.mxu0 0
        %989 = vmatpush2.bf16.msra.mxu0 0
        %990 = vmatprep.subr.bf16.mxu0 0
        %991 = vmatpush2.bf16.msra.mxu0 0
        %992 = vmatprep.subr.bf16.mxu0 0
        %993 = vmatpush2.bf16.msra.mxu0 0
        %994 = vmatprep.subr.bf16.mxu0 0
        %995 = vmatpush2.bf16.msra.mxu0 0
        %996 = vmatprep.subr.bf16.mxu0 0
        %997 = vmatpush2.bf16.msra.mxu0 0
        %998 = vmatprep.subr.bf16.mxu0 0
        %999 = vmatpush2.bf16.msra.mxu0 0
        %1000 = vmatprep.subr.bf16.mxu0 0
        %1001 = vmatpush2.bf16.msra.mxu0 0
        %1002 = vmatprep.mubr.bf16.mxu0 0
        %1003 = vmatmul.mubr.bf16.gmra.mxu0 %v968
        %v1004 = vpop.f32.mrf.mxu0
        %v1005 = vadd.f32 0.0, %v1004
        %v1006 = vpop.f32.mrf.mxu0
        %v1007 = vpop.f32.mrf.mxu0
        %v1008 = vadd.f32 0.0, %v1007
        %v1009 = vpop.f32.mrf.mxu0
        %1010 = vdwg.mxu0
        %v1011 = vpack.c.bf16 %v1008, %v1005
        %v1013 = vunpack.c.l.b16 %v1011
        %v1014 = vunpack.c.h.b16 %v1011
        %v1015 = vpack.c.b16 %v1013, %v1013
        %v1016 = vpack.c.b16 %v1014, %v1014
        %1017 = vrot.lane.b32.xlu0 %v1015, 24
        %v1018 = vpop.permute.xlu0 %1017
        %1019 = vrot.lane.b32.xlu0 %v1016, 24
        %v1020 = vpop.permute.xlu0 %1019
        %vm1023 = vcmask 257216
        %1024 = vst.msk [vmem:[#allocation4] sm:$0xf] %vm1023, %v1018
        %1025 = vst.msk [vmem:[#allocation4 + $0x4] sm:$0xf] %vm1023, %v1020
        %v1026 = vld [vmem:[#allocation3] sm:$0xff]
        %v1027 = vld [vmem:[#allocation3 + $0x8] sm:$0xff]
        %v1028 = vld [vmem:[#allocation4] sm:$0xf]
        %v1029 = vld [vmem:[#allocation4 + $0x4] sm:$0xf]
        %v1030 = vld [vmem:[#allocation10] sm:$0xf]
        %v1031 = vld [vmem:[#allocation10 + $0x4] sm:$0xf]
        %v1032 = vld [vmem:[#allocation10 + $0x8] sm:$0xf]
        %v1033 = vld [vmem:[#allocation10 + $0xc] sm:$0xf]
        %v1036 = vunpack.c.l.b16 %v1028
        %v1037 = vunpack.c.l.b16 %v1029
        %v1038 = vpack.c.b16 %v1037, %v1036
        %v1043 = vunpack.c.l.b16 %v1030
        %v1044 = vunpack.c.l.b16 %v1031
        %v1045 = vunpack.c.l.b16 %v1032
        %v1046 = vunpack.c.l.b16 %v1033
        %v1047 = vpack.c.b16 %v1044, %v1043
        %v1048 = vpack.c.b16 %v1046, %v1045
        %v1052 = vsel %vm331, %v1038, 0
        %1054 = vmatprep.subr.bf16.mxu0 0
        %1055 = vmatpush1.bf16.msra.mxu0 0
        %1056 = vmatprep.subr.bf16.mxu0 0
        %1057 = vmatpush1.bf16.msra.mxu0 0
        %1058 = vmatprep.subr.bf16.mxu0 0
        %1059 = vmatpush1.bf16.msra.mxu0 0
        %1060 = vmatprep.subr.bf16.mxu0 0
        %1061 = vmatpush1.bf16.msra.mxu0 0
        %1062 = vmatprep.subr.bf16.mxu0 0
        %1063 = vmatpush1.bf16.msra.mxu0 0
        %1064 = vmatprep.subr.bf16.mxu0 0
        %1065 = vmatpush1.bf16.msra.mxu0 0
        %1066 = vmatprep.subr.bf16.mxu0 0
        %1067 = vmatpush1.bf16.msra.mxu0 %v1048
        %1068 = vmatprep.subr.bf16.mxu0 0
        %1069 = vmatpush1.bf16.msra.mxu0 %v1047
        %1070 = vmatprep.subr.bf16.mxu0 0
        %1071 = vmatpush2.bf16.msra.mxu0 0
        %1072 = vmatprep.subr.bf16.mxu0 0
        %1073 = vmatpush2.bf16.msra.mxu0 0
        %1074 = vmatprep.subr.bf16.mxu0 0
        %1075 = vmatpush2.bf16.msra.mxu0 0
        %1076 = vmatprep.subr.bf16.mxu0 0
        %1077 = vmatpush2.bf16.msra.mxu0 0
        %1078 = vmatprep.subr.bf16.mxu0 0
        %1079 = vmatpush2.bf16.msra.mxu0 0
        %1080 = vmatprep.subr.bf16.mxu0 0
        %1081 = vmatpush2.bf16.msra.mxu0 0
        %1082 = vmatprep.subr.bf16.mxu0 0
        %1083 = vmatpush2.bf16.msra.mxu0 0
        %1084 = vmatprep.subr.bf16.mxu0 0
        %1085 = vmatpush2.bf16.msra.mxu0 0
        %1086 = vmatprep.mubr.bf16.mxu0 0
        %1087 = vmatmul.mubr.bf16.gmra.mxu0 %v1052
        %v1088 = vpop.f32.mrf.mxu0
        %v1089 = vadd.f32 0.0, %v1088
        %v1090 = vpop.f32.mrf.mxu0
        %v1091 = vpop.f32.mrf.mxu0
        %v1092 = vadd.f32 0.0, %v1091
        %v1093 = vpop.f32.mrf.mxu0
        %1094 = vdwg.mxu0
        %v1095 = vadd.f32 %v1026, %v1089
        %v1096 = vadd.f32 %v1027, %v1092
        %1097 = vst.msk [vmem:[#allocation3] sm:$0xff] %vm331, %v1095
        %1098 = vst.msk [vmem:[#allocation3 + $0x8] sm:$0xff] %vm331, %v1096
        %v1099 = vld [vmem:[#allocation3] sm:$0xff]
        %v1100 = vld [vmem:[#allocation3 + $0x8] sm:$0xff]
        %v1101 = vpack.c.bf16 %v1100, %v1099
        %v1103 = vunpack.c.l.b16 %v1101
        %v1104 = vunpack.c.h.b16 %v1101
        %v1105 = vpack.c.b16 %v1103, %v1103
        %v1106 = vpack.c.b16 %v1104, %v1104
        %1109 = vst.msk [vmem:[%s325] sm:$0xf] %vm385, %v1105
        %1110 = vst.msk [vmem:[%s325 + $0x4] sm:$0xf] %vm385, %v1106
        %s1111 = sand.u32 %s185, 1
        %s1112 = scalar_lea.sflag [#allocation7], %s1111
        %s1113 = sand.u32 %s185, 1
        %s1114 = smul.addr %s1113, 8
        %s1115 = scalar_lea.vmem [#allocation11], %s1114
        // Predicated region
        $region61: #{tpu_custom_call.1} parent=47 // pred_check
          %p1116 = pneg %p195
        $region62: #{tpu_custom_call.1} parent=47 // pred_check_branch
          %1118 = sbr.rel (%p1116) target = $region64
        $region63: #{tpu_custom_call.1} parent=47 // pred_region
          %s1120 = ssub.s32 128, 128
          %1121 = vsyncadd %s1112, %s1120
          %s1122 = smul.addr %s25, 2
          %s1123 = smul.addr %s1122, 64
          %s1124 = scalar_lea.hbm %s7, %s1123
          %s1125 = sshll.u32 %s1115, 4
          %s1126 = int_to_ptr.vmem [resolvable:$true] %s1125
          %1131 = dma.vmem_to_hbm [thread:$0]  %s1126, 128, %s1124, %s1112, 64, 64, 4
        $region64: #{tpu_custom_call.1} parent=47 // pred_fallthru
          _
      $region48: #{tpu_custom_call.1} parent=5 // pred_fallthru
        _
      %p1132 = scmp.le.s32.totalorder 2, %s20
      // Predicated region
      $region65: #{tpu_custom_call.1} parent=5 // pred_check
        %p1133 = pneg %p1132
      $region66: #{tpu_custom_call.1} parent=5 // pred_check_branch
        %1135 = sbr.rel (%p1133) target = $region68
      $region67: #{tpu_custom_call.1} parent=5 // pred_region
        %s1136 = ssub.s32 %s20, 2
        // Predicated region
        $region69: #{tpu_custom_call.1} parent=67 // pred_check
          %p1137 = pneg %p201
        $region70: #{tpu_custom_call.1} parent=67 // pred_check_branch
          %1139 = sbr.rel (%p1137) target = $region72
        $region71: #{tpu_custom_call.1} parent=67 // pred_region
          %s1140 = sand.u32 %s186, 1
          %s1141 = scalar_lea.sflag [#allocation7], %s1140
          %s1142 = sand.u32 %s186, 1
          %s1143 = smul.addr %s1142, 8
          %s1144 = scalar_lea.vmem [#allocation11], %s1143
          %1145 = dma.done %s1141, 128
        $region72: #{tpu_custom_call.1} parent=67 // pred_fallthru
          _
      $region68: #{tpu_custom_call.1} parent=5 // pred_fallthru
        _
    $region6: #{tpu_custom_call.1} parent=1 // loop_footer
      %s24 = sadd.s32 1, %s20
    $region7: #{tpu_custom_call.1} parent=1 // loop_footer_branch
      %19 = sbr.rel target = $region3
    $region8: #{tpu_custom_call.1} parent=1 // loop_exit
      _
    %1146 = vsyncpa [#allocation6], 1
    %s1147 = scalar_lea.sflag [#allocation6], 1
    %1148 = vsyncpa %s1147, 1
    %1149 = vsyncpa [#allocation9], 1
    %1150 = vsyncpa [#allocation7], 1
    %s1151 = scalar_lea.sflag [#allocation7], 1
    %1152 = vsyncpa %s1151, 1

</llo_original>
